<compile_context>
chip_gen: v7x
topology: tpu7x:2x2x1
jax: 0.10.0
libtpu: 0.0.40
codegen_flags: <defaults>
</compile_context>

<pallas_src>
import functools

import jax
import jax.numpy as jnp
import numpy as np
from jax import lax
from jax.experimental import pallas as pl
from jax.experimental.pallas import tpu as pltpu

LN_EPS = 1e-5
NEG_INF = -1e30


def _vmem_limit_bytes():
    """Generation-aware scoped-VMEM cap (v7x: 64 MiB phys, v5e/v6e: 128 MiB)."""
    cap = 128 * 1024 * 1024
    try:
        info = pltpu.get_tpu_info()
        c = getattr(info, "vmem_capacity_bytes", None)
        if c:
            cap = int(c)
    except Exception:
        pass
    # ~25% headroom for compiler-internal scratch; never below 32 MiB.
    return max(32 * 1024 * 1024, min((cap * 3) // 4, 100 * 1024 * 1024))


def _gelu_tanh(x):
    c = 0.7978845608028654  # sqrt(2/pi)
    # Horner form: c*(x + 0.044715*x^3) == x*(c + c*0.044715*x*x)
    return 0.5 * x * (1.0 + jnp.tanh(x * (c + (0.044715 * c) * x * x)))


def _layernorm(h, g, b):
    mu = jnp.mean(h, axis=-1, keepdims=True)
    var = jnp.mean((h - mu) ** 2, axis=-1, keepdims=True)
    return (h - mu) * lax.rsqrt(var + LN_EPS) * g + b


# --------------------------------------------------------------------------
# Stage 1: LN1 + fused QKV projection, tiled over (batch, seq, qkv columns).
# LN1 output cached in VMEM scratch at n == 0; weight streamed column-tile by
# column-tile so its VMEM footprint is bounded at real model sizes.
# --------------------------------------------------------------------------
def _ln1_qkv_kernel(x_ref, w_ref, b_ref, g_ref, beta_ref, qkv_ref, hln_sc):
    @pl.when(pl.program_id(2) == 0)
    def _():
        hln_sc[...] = _layernorm(x_ref[...], g_ref[...],
                                 beta_ref[...]).astype(jnp.bfloat16)

    qkv_ref[...] = (jnp.dot(hln_sc[...], w_ref[...],
                            preferred_element_type=jnp.float32)
                    + b_ref[...]).astype(jnp.bfloat16)


# --------------------------------------------------------------------------
# Stage 2: flash causal attention (GQA) + output projection + residual 1.
# grid = (B, q_tiles, kv_heads, kv_tiles); kv is the reduction axis (last).
# All `group` q heads sharing a kv head are processed per grid step.
# --------------------------------------------------------------------------
def _attn_kernel(q_ref, k_ref, v_ref, x_ref, wo_ref, bo_ref, out_ref,
                 m_sc, l_sc, acc_sc, *, tile_q, tile_k, group, dh):
    qi = pl.program_id(1)
    kh = pl.program_id(2)
    kvi = pl.program_id(3)
    n_kv = pl.num_programs(3)

    q_start = qi * tile_q
    k_start = kvi * tile_k

    @pl.when(kvi == 0)
    def _():
        m_sc[...] = jnp.full_like(m_sc[...], -jnp.inf)
        l_sc[...] = jnp.zeros_like(l_sc[...])
        acc_sc[...] = jnp.zeros_like(acc_sc[...])

    def flash_step(masked):
        k = k_ref[...]
        v = v_ref[...]
        if masked:
            row = q_start + lax.broadcasted_iota(jnp.int32, (tile_q, tile_k), 0)
            col = k_start + lax.broadcasted_iota(jnp.int32, (tile_q, tile_k), 1)
            keep = row >= col
        for g in range(group):
            # Q columns for head g of this kv group (scale pre-folded).
            q_g = q_ref[:, g * dh:(g + 1) * dh]
            s = lax.dot_general(q_g, k, (((1,), (1,)), ((), ())),
                                preferred_element_type=jnp.float32)
            if masked:
                s = jnp.where(keep, s, NEG_INF)
            m_prev = m_sc[g]
            m_new = jnp.maximum(m_prev, jnp.max(s, axis=-1, keepdims=True))
            alpha = jnp.exp(m_prev - m_new)
            p = jnp.exp(s - m_new)
            l_sc[g] = alpha * l_sc[g] + jnp.sum(p, axis=-1, keepdims=True)
            acc_sc[g] = alpha * acc_sc[g] + jnp.dot(
                p.astype(jnp.bfloat16), v, preferred_element_type=jnp.float32)
            m_sc[g] = m_new

    # Tiles entirely at-or-below the diagonal: no mask needed.
    @pl.when(k_start + tile_k <= q_start + 1)
    def _():
        flash_step(masked=False)

    # Tiles straddling the diagonal: build/apply the causal mask.
    # Fully-future tiles (k_start >= q_start + tile_q) fall in neither branch.
    @pl.when(jnp.logical_and(k_start + tile_k > q_start + 1,
                             k_start < q_start + tile_q))
    def _():
        flash_step(masked=True)

    # Finalize this kv group: normalize all `group` heads, do one output
    # projection with K-depth group*dh, and accumulate into the residual
    # output block (no (S, attn_dim) materialization).
    @pl.when(kvi == n_kv - 1)
    def _():
        parts = []
        for g in range(group):
            inv = pl.reciprocal(l_sc[g], approx=True)            # (TQ, 1)
            parts.append((acc_sc[g] * inv).astype(jnp.bfloat16))  # (TQ, dh)
        o = parts[0] if group == 1 else jnp.concatenate(parts, axis=-1)
        contrib = jnp.dot(o, wo_ref[...],
                          preferred_element_type=jnp.float32)     # (TQ, H)

        @pl.when(kh == 0)
        def _():
            out_ref[...] = x_ref[...] + bo_ref[...] + contrib

        @pl.when(kh != 0)
        def _():
            out_ref[...] = out_ref[...] + contrib


# --------------------------------------------------------------------------
# Stage 3: LN2 + MLP (fc1 -> gelu -> fc2), tiled over the ffn dimension,
# fused bias + residual 2.  grid = (B, seq_tiles, ffn_tiles).
# --------------------------------------------------------------------------
def _ln2_mlp_kernel(h1_ref, g_ref, b_ref, w1_ref, b1_ref, w2_ref, b2_ref,
                    out_ref, hln_sc, acc_sc):
    f = pl.program_id(2)

    @pl.when(f == 0)
    def _():
        h1 = h1_ref[...]                                  # (TS, H) f32
        hln_sc[...] = _layernorm(h1, g_ref[...], b_ref[...]).astype(jnp.bfloat16)
        acc_sc[...] = h1 + b2_ref[...]                    # residual + fc2 bias

    fc1 = jnp.dot(hln_sc[...], w1_ref[...],
                  preferred_element_type=jnp.float32) + b1_ref[...]
    act = _gelu_tanh(fc1)                                 # f32 elementwise
    acc_sc[...] += jnp.dot(act.astype(jnp.bfloat16), w2_ref[...],
                           preferred_element_type=jnp.float32)

    @pl.when(f == pl.num_programs(2) - 1)
    def _():
        out_ref[...] = acc_sc[...]


# --------------------------------------------------------------------------
# Wrapper
# --------------------------------------------------------------------------
def transformer_layer(x, params, *, num_q_heads, num_kv_heads,
                      tile_s=256, tile_n=1024, tile_q=256, tile_k=256,
                      tile_f=512):
    B, S, H = x.shape
    attn_dim = params["wo"].shape[0]
    ffn_dim = params["w1"].shape[1]
    nq, nkv = num_q_heads, num_kv_heads
    dh = attn_dim // nq
    group = nq // nkv
    qkv_dim = (nq + 2 * nkv) * dh

    # Clamp tiles to the (possibly small) problem dims.
    tile_s = min(tile_s, S)
    tile_q = min(tile_q, S)
    tile_k = min(tile_k, S)
    tile_n = min(tile_n, qkv_dim)
    tile_f = min(tile_f, ffn_dim)

    assert nq % nkv == 0
    assert S % tile_s == 0 and S % tile_q == 0 and S % tile_k == 0
    assert qkv_dim % tile_n == 0 and ffn_dim % tile_f == 0
    assert H % 128 == 0 and dh % 128 == 0 and tile_n % 128 == 0

    f32, bf16 = jnp.float32, jnp.bfloat16
    vmem = _vmem_limit_bytes()

    # Fold the softmax scale into the Q columns of the fused QKV projection
    # (removes the per-kv-step score rescale in the attention inner loop).
    scale = float(dh) ** -0.5          # no inverse-layer-idx scaling
    col_scale = jnp.concatenate([jnp.full((nq * dh,), scale, f32),
                                 jnp.ones((2 * nkv * dh,), f32)])
    wqkv = (params["wqkv"] * col_scale[None, :]).astype(bf16)
    bqkv = params["bqkv"] * col_scale[None, :]
    wo = params["wo"].astype(bf16)
    w1 = params["w1"].astype(bf16)
    w2 = params["w2"].astype(bf16)

    def cparams(sems):
        return pltpu.CompilerParams(dimension_semantics=sems,
                                    vmem_limit_bytes=vmem)

    # ---- stage 1: LN1 + QKV (column-tiled weight) ---------------------------
    nS, nN = S // tile_s, qkv_dim // tile_n
    qkv = pl.pallas_call(
        _ln1_qkv_kernel,
        grid=(B, nS, nN),
        in_specs=[
            pl.BlockSpec((pl.Squeezed(), tile_s, H), lambda b, s, n: (b, s, 0)),
            pl.BlockSpec((H, tile_n), lambda b, s, n: (0, n)),
            pl.BlockSpec((1, tile_n), lambda b, s, n: (0, n)),
            pl.BlockSpec((1, H), lambda b, s, n: (0, 0)),
            pl.BlockSpec((1, H), lambda b, s, n: (0, 0)),
        ],
        out_specs=pl.BlockSpec((pl.Squeezed(), tile_s, tile_n),
                               lambda b, s, n: (b, s, n)),
        out_shape=jax.ShapeDtypeStruct((B, S, qkv_dim), bf16),
        scratch_shapes=[pltpu.VMEM((tile_s, H), bf16)],   # cached LN1 output
        compiler_params=cparams(("parallel", "parallel", "arbitrary")),
    )(x, wqkv, bqkv, params["ln1_g"], params["ln1_b"])

    # ---- stage 2: flash attention + o-proj + residual 1 ---------------------
    nQ, nK = S // tile_q, S // tile_k
    gdh = group * dh

    def kv_block(qi, kvi):
        # Clamp fully-future kv steps to the diagonal block: the kernel skips
        # them and the re-requested block is already resident (no extra DMA).
        return jnp.minimum(kvi, ((qi + 1) * tile_q - 1) // tile_k)

    h1 = pl.pallas_call(
        functools.partial(_attn_kernel, tile_q=tile_q, tile_k=tile_k,
                          group=group, dh=dh),
        grid=(B, nQ, nkv, nK),
        in_specs=[
            # Q: the `group` heads that share kv head kh (scale pre-folded).
            pl.BlockSpec((pl.Squeezed(), tile_q, gdh),
                         lambda b, qi, kh, kv: (b, qi, kh)),
            # K for kv head kh.
            pl.BlockSpec((pl.Squeezed(), tile_k, dh),
                         lambda b, qi, kh, kv: (b, kv_block(qi, kv), nq + kh)),
            # V for kv head kh.
            pl.BlockSpec((pl.Squeezed(), tile_k, dh),
                         lambda b, qi, kh, kv: (b, kv_block(qi, kv),
                                                nq + nkv + kh)),
            # Residual input.
            pl.BlockSpec((pl.Squeezed(), tile_q, H),
                         lambda b, qi, kh, kv: (b, qi, 0)),
            # o-projection rows for this group of q heads (K-depth group*dh).
            pl.BlockSpec((gdh, H), lambda b, qi, kh, kv: (kh, 0)),
            pl.BlockSpec((1, H), lambda b, qi, kh, kv: (0, 0)),
        ],
        out_specs=pl.BlockSpec((pl.Squeezed(), tile_q, H),
                               lambda b, qi, kh, kv: (b, qi, 0)),
        out_shape=jax.ShapeDtypeStruct((B, S, H), f32),
        scratch_shapes=[
            pltpu.VMEM((group, tile_q, 1), f32),    # running max (per head)
            pltpu.VMEM((group, tile_q, 1), f32),    # running denom (per head)
            pltpu.VMEM((group, tile_q, dh), f32),   # running numer (per head)
        ],
        compiler_params=cparams(
            ("parallel", "parallel", "arbitrary", "arbitrary")),
    )(qkv, qkv, qkv, x, wo, params["bo"])

    # ---- stage 3: LN2 + MLP + residual 2 ------------------------------------
    nF = ffn_dim // tile_f
    out = pl.pallas_call(
        _ln2_mlp_kernel,
        grid=(B, nS, nF),
        in_specs=[
            pl.BlockSpec((pl.Squeezed(), tile_s, H), lambda b, s, f: (b, s, 0)),
            pl.BlockSpec((1, H), lambda b, s, f: (0, 0)),
            pl.BlockSpec((1, H), lambda b, s, f: (0, 0)),
            pl.BlockSpec((H, tile_f), lambda b, s, f: (0, f)),
            pl.BlockSpec((1, tile_f), lambda b, s, f: (0, f)),
            pl.BlockSpec((tile_f, H), lambda b, s, f: (f, 0)),
            pl.BlockSpec((1, H), lambda b, s, f: (0, 0)),
        ],
        out_specs=pl.BlockSpec((pl.Squeezed(), tile_s, H),
                               lambda b, s, f: (b, s, 0)),
        out_shape=jax.ShapeDtypeStruct((B, S, H), f32),
        scratch_shapes=[
            pltpu.VMEM((tile_s, H), bf16),     # cached LN2 output
            pltpu.VMEM((tile_s, H), f32),      # fc2 accumulator (+residual)
        ],
        compiler_params=cparams(("parallel", "parallel", "arbitrary")),
    )(h1, params["ln2_g"], params["ln2_b"], w1, params["b1"], w2, params["b2"])

    return out


# --------------------------------------------------------------------------
# Parameter init + pure-JAX reference (f32)
# --------------------------------------------------------------------------
def init_params(key, hidden_dim, attn_dim, ffn_dim, num_q_heads, num_kv_heads):
    head_dim = attn_dim // num_q_heads
    qkv_out = (num_q_heads + 2 * num_kv_heads) * head_dim
    ks = jax.random.split(key, 8)

    def w(k, shape):
        return 0.05 * jax.random.normal(k, shape, jnp.float32)

    return dict(
        wqkv=w(ks[0], (hidden_dim, qkv_out)),
        bqkv=w(ks[1], (1, qkv_out)),
        wo=w(ks[2], (attn_dim, hidden_dim)),
        bo=w(ks[3], (1, hidden_dim)),
        ln1_g=jnp.ones((1, hidden_dim), jnp.float32),
        ln1_b=jnp.zeros((1, hidden_dim), jnp.float32),
        ln2_g=jnp.ones((1, hidden_dim), jnp.float32),
        ln2_b=jnp.zeros((1, hidden_dim), jnp.float32),
        w1=w(ks[4], (hidden_dim, ffn_dim)),
        b1=w(ks[5], (1, ffn_dim)),
        w2=w(ks[6], (ffn_dim, hidden_dim)),
        b2=w(ks[7], (1, hidden_dim)),
    )


def reference_forward(x, params, *, num_q_heads, num_kv_heads):
    """Pure-JAX f32 reference mirroring the PyTorch forward (eval mode)."""
    B, S, H = x.shape
    attn_dim = params["wo"].shape[0]
    dh = attn_dim // num_q_heads
    nq, nkv = num_q_heads, num_kv_heads
    group = nq // nkv

    def ln(h, g, b):
        mu = h.mean(-1, keepdims=True)
        var = ((h - mu) ** 2).mean(-1, keepdims=True)
        return (h - mu) / jnp.sqrt(var + LN_EPS) * g + b

    h_ln1 = ln(x, params["ln1_g"][0], params["ln1_b"][0])
    qkv = h_ln1 @ params["wqkv"] + params["bqkv"][0]
    q = qkv[..., : nq * dh].reshape(B, S, nq, dh)
    k = qkv[..., nq * dh: (nq + nkv) * dh].reshape(B, S, nkv, dh)
    v = qkv[..., (nq + nkv) * dh:].reshape(B, S, nkv, dh)
    k = jnp.repeat(k, group, axis=2)
    v = jnp.repeat(v, group, axis=2)
    scale = float(dh) ** -0.5
    s = jnp.einsum("bqhd,bkhd->bhqk", q, k) * scale
    mask = jnp.tril(jnp.ones((S, S), bool))
    s = jnp.where(mask, s, NEG_INF)
    p = jax.nn.softmax(s, axis=-1)
    o = jnp.einsum("bhqk,bkhd->bqhd", p, v).reshape(B, S, attn_dim)
    o = o @ params["wo"]
    r1 = o + params["bo"][0] + x
    h_ln2 = ln(r1, params["ln2_g"][0], params["ln2_b"][0])
    fc1 = h_ln2 @ params["w1"] + params["b1"][0]
    fc2 = _gelu_tanh(fc1) @ params["w2"]
    return fc2 + params["b2"][0] + r1


if __name__ == "__main__":
    # Small but lane-aligned shapes: head_dim=128, GQA group=2, and two tiles
    # along seq / qkv-column / ffn axes so the flash reduction, causal-skip,
    # stage-1 column tiling and the ffn accumulation are all exercised.
    B, S = 2, 512
    hidden_dim, attn_dim, ffn_dim = 256, 256, 1024
    num_q_heads, num_kv_heads = 2, 1          # GQA group = 2

    key = jax.random.PRNGKey(0)
    kx, kp = jax.random.split(key)
    x = jax.random.normal(kx, (B, S, hidden_dim), jnp.float32)
    params = init_params(kp, hidden_dim, attn_dim, ffn_dim,
                         num_q_heads, num_kv_heads)

    out = transformer_layer(x, params,
                            num_q_heads=num_q_heads,
                            num_kv_heads=num_kv_heads,
                            tile_s=256, tile_n=256, tile_q=256, tile_k=256,
                            tile_f=512)
    out = jax.block_until_ready(out)

    assert out.shape == (B, S, hidden_dim)
    assert bool(jnp.all(jnp.isfinite(out)))

    ref = reference_forward(x, params,
                            num_q_heads=num_q_heads,
                            num_kv_heads=num_kv_heads)
    np.testing.assert_allclose(np.asarray(out), np.asarray(ref),
                               rtol=5e-2, atol=5e-2)
    print("KERNEL_OK")
</pallas_src>

<mosaic_0001>
module attributes {stable_mosaic.version = 11 : i64} {
  func.func @_ln1_qkv_kernel(%arg0: i32, %arg1: i32, %arg2: i32, %arg3: memref<1x256x256xf32, #tpu.memory_space<vmem>>, %arg4: memref<256x256xbf16, #tpu.memory_space<vmem>>, %arg5: memref<1x256xf32, #tpu.memory_space<vmem>>, %arg6: memref<1x256xf32, #tpu.memory_space<vmem>>, %arg7: memref<1x256xf32, #tpu.memory_space<vmem>>, %arg8: memref<1x256x256xbf16, #tpu.memory_space<vmem>>, %arg9: memref<256x256xbf16, #tpu.memory_space<vmem>>) attributes {dimension_semantics = [#tpu.dimension_semantics<parallel>, #tpu.dimension_semantics<parallel>, #tpu.dimension_semantics<arbitrary>], iteration_bounds = array<i64: 2, 2, 2>, scalar_prefetch = 0 : i64, scratch_operands = 1 : i64, tpu.core_type = #tpu.core_type<tc>, window_params = [{transform_indices = @transform_0, window_bounds = array<i64: 1, 256, 256>}, {transform_indices = @transform_1, window_bounds = array<i64: 256, 256>}, {transform_indices = @transform_2, window_bounds = array<i64: 1, 256>}, {pipeline_mode = #tpu.pipeline_mode<synchronous>, transform_indices = @transform_3, window_bounds = array<i64: 1, 256>}, {pipeline_mode = #tpu.pipeline_mode<synchronous>, transform_indices = @transform_4, window_bounds = array<i64: 1, 256>}, {transform_indices = @transform_5, window_bounds = array<i64: 1, 256, 256>}]} {
    %c0_i32 = arith.constant 0 : i32
    %0 = arith.cmpi eq, %arg2, %c0_i32 : i32
    %1 = arith.extui %0 : i1 to i32
    %c0_i32_0 = arith.constant 0 : i32
    %2 = arith.cmpi ne, %1, %c0_i32_0 : i32
    scf.if %2 {
      %c0_9 = arith.constant 0 : index
      %c0_10 = arith.constant 0 : index
      %c0_11 = arith.constant 0 : index
      %13 = vector.load %arg3[%c0_9, %c0_10, %c0_11] : memref<1x256x256xf32, #tpu.memory_space<vmem>>, vector<1x256x256xf32>
      %14 = vector.shape_cast %13 : vector<1x256x256xf32> to vector<256x256xf32>
      %c0_12 = arith.constant 0 : index
      %c0_13 = arith.constant 0 : index
      %15 = vector.load %arg6[%c0_12, %c0_13] : memref<1x256xf32, #tpu.memory_space<vmem>>, vector<1x256xf32>
      %c0_14 = arith.constant 0 : index
      %c0_15 = arith.constant 0 : index
      %16 = vector.load %arg7[%c0_14, %c0_15] : memref<1x256xf32, #tpu.memory_space<vmem>>, vector<1x256xf32>
      %cst_16 = arith.constant dense<0.000000e+00> : vector<256xf32>
      %17 = vector.multi_reduction <add>, %14, %cst_16 [1] : vector<256x256xf32> to vector<256xf32>
      %18 = vector.shape_cast %17 : vector<256xf32> to vector<256x1xf32>
      %cst_17 = arith.constant 2.560000e+02 : f32
      %19 = vector.broadcast %cst_17 : f32 to vector<256x1xf32>
      %20 = arith.divf %18, %19 : vector<256x1xf32>
      %21 = vector.broadcast %20 : vector<256x1xf32> to vector<256x256xf32>
      %22 = arith.subf %14, %21 : vector<256x256xf32>
      %23 = arith.mulf %22, %22 : vector<256x256xf32>
      %cst_18 = arith.constant dense<0.000000e+00> : vector<256xf32>
      %24 = vector.multi_reduction <add>, %23, %cst_18 [1] : vector<256x256xf32> to vector<256xf32>
      %25 = vector.shape_cast %24 : vector<256xf32> to vector<256x1xf32>
      %cst_19 = arith.constant 2.560000e+02 : f32
      %26 = vector.broadcast %cst_19 : f32 to vector<256x1xf32>
      %27 = arith.divf %25, %26 : vector<256x1xf32>
      %28 = vector.broadcast %20 : vector<256x1xf32> to vector<256x256xf32>
      %29 = arith.subf %14, %28 : vector<256x256xf32>
      %cst_20 = arith.constant 9.99999974E-6 : f32
      %30 = vector.broadcast %cst_20 : f32 to vector<256x1xf32>
      %31 = arith.addf %27, %30 : vector<256x1xf32>
      %32 = math.rsqrt %31 : vector<256x1xf32>
      %33 = vector.broadcast %32 : vector<256x1xf32> to vector<256x256xf32>
      %34 = arith.mulf %29, %33 : vector<256x256xf32>
      %35 = vector.broadcast %15 : vector<1x256xf32> to vector<256x256xf32>
      %36 = arith.mulf %34, %35 : vector<256x256xf32>
      %37 = vector.broadcast %16 : vector<1x256xf32> to vector<256x256xf32>
      %38 = arith.addf %36, %37 : vector<256x256xf32>
      %39 = arith.truncf %38 : vector<256x256xf32> to vector<256x256xbf16>
      %c0_21 = arith.constant 0 : index
      %c0_22 = arith.constant 0 : index
      %40 = vector.load %arg9[%c0_21, %c0_22] : memref<256x256xbf16, #tpu.memory_space<vmem>>, vector<256x256xbf16>
      tpu.vector_store %arg9[%c0_21, %c0_22], %39 {strides = array<i32>} : memref<256x256xbf16, #tpu.memory_space<vmem>>, vector<256x256xbf16>,
    } else {
    }
    %c0 = arith.constant 0 : index
    %c0_1 = arith.constant 0 : index
    %3 = vector.load %arg9[%c0, %c0_1] : memref<256x256xbf16, #tpu.memory_space<vmem>>, vector<256x256xbf16>
    %c0_2 = arith.constant 0 : index
    %c0_3 = arith.constant 0 : index
    %4 = vector.load %arg4[%c0_2, %c0_3] : memref<256x256xbf16, #tpu.memory_space<vmem>>, vector<256x256xbf16>
    %cst = arith.constant dense<0.000000e+00> : vector<256x256xf32>
    %5 = tpu.matmul %3, %4, %cst {dimension_numbers = #tpu.dot_dimension_numbers<[1], [0], [0], [1], [0, 0, 1, 1], [], []>} : vector<256x256xbf16>, vector<256x256xbf16>, vector<256x256xf32> -> vector<256x256xf32>
    %c0_4 = arith.constant 0 : index
    %c0_5 = arith.constant 0 : index
    %6 = vector.load %arg5[%c0_4, %c0_5] : memref<1x256xf32, #tpu.memory_space<vmem>>, vector<1x256xf32>
    %7 = vector.broadcast %6 : vector<1x256xf32> to vector<256x256xf32>
    %8 = arith.addf %5, %7 : vector<256x256xf32>
    %9 = arith.truncf %8 : vector<256x256xf32> to vector<256x256xbf16>
    %c0_6 = arith.constant 0 : index
    %c0_7 = arith.constant 0 : index
    %c0_8 = arith.constant 0 : index
    %10 = vector.load %arg8[%c0_6, %c0_7, %c0_8] : memref<1x256x256xbf16, #tpu.memory_space<vmem>>, vector<1x256x256xbf16>
    %11 = vector.shape_cast %10 : vector<1x256x256xbf16> to vector<256x256xbf16>
    %12 = vector.shape_cast %9 : vector<256x256xbf16> to vector<1x256x256xbf16>
    tpu.vector_store %arg8[%c0_6, %c0_7, %c0_8], %12 {strides = array<i32>} : memref<1x256x256xbf16, #tpu.memory_space<vmem>>, vector<1x256x256xbf16>,
    return
  }
  func.func @transform_0(%arg0: i32, %arg1: i32, %arg2: i32) -> (i32, i32, i32) {
    %c0_i32 = arith.constant 0 : i32
    %c0_i32_0 = arith.constant 0 : i32
    return %arg0, %arg1, %c0_i32 : i32, i32, i32
  }
  func.func @transform_1(%arg0: i32, %arg1: i32, %arg2: i32) -> (i32, i32) {
    %c0_i32 = arith.constant 0 : i32
    %c0_i32_0 = arith.constant 0 : i32
    return %c0_i32, %arg2 : i32, i32
  }
  func.func @transform_2(%arg0: i32, %arg1: i32, %arg2: i32) -> (i32, i32) {
    %c0_i32 = arith.constant 0 : i32
    %c0_i32_0 = arith.constant 0 : i32
    return %c0_i32, %arg2 : i32, i32
  }
  func.func @transform_3(%arg0: i32, %arg1: i32, %arg2: i32) -> (i32, i32) {
    %c0_i32 = arith.constant 0 : i32
    %c0_i32_0 = arith.constant 0 : i32
    %c0_i32_1 = arith.constant 0 : i32
    return %c0_i32, %c0_i32_0 : i32, i32
  }
  func.func @transform_4(%arg0: i32, %arg1: i32, %arg2: i32) -> (i32, i32) {
    %c0_i32 = arith.constant 0 : i32
    %c0_i32_0 = arith.constant 0 : i32
    %c0_i32_1 = arith.constant 0 : i32
    return %c0_i32, %c0_i32_0 : i32, i32
  }
  func.func @transform_5(%arg0: i32, %arg1: i32, %arg2: i32) -> (i32, i32, i32) {
    %c0_i32 = arith.constant 0 : i32
    return %arg0, %arg1, %arg2 : i32, i32, i32
  }
}

</mosaic_0001>

<llo_original>
// kernel: tpu_custom_call.1
$region0: #{tpu_custom_call.1}
  #allocation0 [shape = 'u32[]', space=smem, size = 0x4, offset = 0x4, fixed_abs, tag = 'smem constant byte address 0x4 - core index']
  #allocation1 [shape = 'u32[144,128]{1,0:T(1,128)}', space=vmem, size = 0x12000, scoped, tag = 'internal scratch']
  #allocation2 [shape = 'bf16[256,256]{1,0:T(16,128)(2,1)}', space=vmem, size = 0x20000, scoped, tag = 'scratch operand']
  %s0 = inlined_call_operand.hbm [shape: f32[2,512,256], index: 0, kind: input, shape index: {}]
  %s1 = inlined_call_operand.hbm [shape: bf16[256,512], index: 1, kind: input, shape index: {}]
  %s2 = inlined_call_operand.hbm [shape: f32[1,512], index: 2, kind: input, shape index: {}]
  %s3 = inlined_call_operand.hbm [shape: f32[1,256], index: 3, kind: input, shape index: {}]
  %s4 = inlined_call_operand.hbm [shape: f32[1,256], index: 4, kind: input, shape index: {}]
  %s5 = inlined_call_operand.hbm [shape: bf16[2,512,512], index: 5, kind: output, shape index: {}]
  %s6 = sld [smem:[#allocation0]]
  $region77: #{tpu_custom_call.1} parent=0
    _
  %s8 = ssub.s32 1, %s6
  %s9 = scalar_select 0, %s8, %s6
  $region1: #{tpu_custom_call.1} parent=0
    #allocation3 [shape = 'u8[524288]{0}', space=vmem, size = 0x80000, scoped, tag = 'input window, operand 0']
    #allocation4 [shape = 's32[2]{0}', space=sflag, size = 0x8, scoped, tag = 'scoped memory for tpu_custom_call.1']
    #allocation5 [shape = 's32[2]{0}', space=sflag, size = 0x8, scoped, tag = 'scoped memory for tpu_custom_call.1']
    #allocation6 [shape = 'u8[262144]{0}', space=vmem, size = 0x40000, scoped, tag = 'input window, operand 1']
    #allocation7 [shape = 's32[2]{0}', space=sflag, size = 0x8, scoped, tag = 'scoped memory for tpu_custom_call.1']
    #allocation8 [shape = 'u8[2048]{0}', space=vmem, size = 0x800, scoped, tag = 'input window, operand 2']
    #allocation9 [shape = 'u8[1024]{0}', space=vmem, size = 0x400, scoped, tag = 'input window, operand 3, single buffered']
    #allocation10 [shape = 's32[1]{0}', space=sflag, size = 0x4, scoped, tag = 'scoped memory for tpu_custom_call.1']
    #allocation11 [shape = 'u8[1024]{0}', space=vmem, size = 0x400, scoped, tag = 'input window, operand 4, single buffered']
    #allocation12 [shape = 'u8[262144]{0}', space=vmem, size = 0x40000, scoped, tag = 'output window, operand 0']
    %10 = vsyncpa [#allocation4], 0
    %s11 = scalar_lea.sflag [#allocation4], 1
    %12 = vsyncpa %s11, 0
    %13 = vsyncpa [#allocation7], 0
    %s14 = scalar_lea.sflag [#allocation7], 1
    %15 = vsyncpa %s14, 0
    %16 = vsyncpa [#allocation10], 0
    %17 = vsyncpa [#allocation5], 0
    %s18 = scalar_lea.sflag [#allocation5], 1
    %19 = vsyncpa %s18, 0
    loop: start=0, step=1, limit=10
    $region2: #{tpu_custom_call.1} parent=1 // loop_pre_header
      _
    $region3: #{tpu_custom_call.1} parent=1 // loop_header
      %s21 = sphi 0, %s25
      %p22 = scmp.ge.s32.totalorder %s21, 10
      %s28 = sphi 0, %s47
      %s29 = sphi 0, %s43
      %s30 = sphi 0, %s39
      %s31 = sphi 0, %s28
      %s32 = sphi 0, %s29
      %s33 = sphi 0, %s30
      %s34 = sphi 0, %s31
      %s35 = sphi 0, %s32
      %s36 = sphi 0, %s33
      %s52 = sphi 0, %s54
      %s55 = sphi 0, %s52
      %s56 = sphi 0, %s55
      %s72 = sphi 0, %s56
      %s78 = sphi 0, %s80
      %s81 = sphi 0, %s78
      %s82 = sphi 0, %s81
      %s98 = sphi 0, %s82
      %s104 = sphi 0, %s106
      %s107 = sphi 0, %s104
      %s108 = sphi 0, %s107
      %s124 = sphi 0, %s108
      %s128 = sphi 0, %s128
      %s130 = sphi 0, %s128
      %s131 = sphi 0, %s130
      %s145 = sphi 0, %s131
      %s149 = sphi 0, %s149
      %s151 = sphi 0, %s149
      %s152 = sphi 0, %s151
      %s166 = sphi 0, %s152
      %s176 = sphi 0, %s178
      %s179 = sphi 0, %s176
      %s180 = sphi 0, %s179
      %s196 = sphi 0, %s180
    $region4: #{tpu_custom_call.1} parent=1 // loop_header_branch
      %24 = sbr.rel (%p22) target = $region8
    $region5: #{tpu_custom_call.1} parent=1 // loop_body
      %s26 = ssub.s32 %s21, 1
      %s27 = ssub.s32 %s21, 2
      %s37 = sadd.s32 1, %s30
      %p38 = scmp.ge.s32.totalorder %s37, 2
      %s39 = scalar_select %p38, 0, %s37
      %s40 = sadd.s32 1, %s29
      %s41 = scalar_select %p38, %s40, %s29
      %p42 = scmp.ge.s32.totalorder %s41, 2
      %s43 = scalar_select %p42, 0, %s41
      %s44 = sadd.s32 1, %s28
      %s45 = scalar_select %p42, %s44, %s28
      %p46 = scmp.ge.s32.totalorder %s45, 2
      %s47 = scalar_select %p46, 0, %s45
      %s48 = ssub.s32 %s28, %s47
      %s49 = ssub.s32 %s29, %s43
      %s50 = sor.u32 %s48, %s49
      %p51 = scmp.eq.s32.totalorder %s50, 0
      %s53 = sadd.s32 %s52, 1
      %s54 = scalar_select %p51, %s52, %s53
      %p57 = pneg %p51
      %p58 = scmp.eq.s32.totalorder %s21, 7
      %p59 = por %p57, %p58
      %p60 = scmp.ne.s32.totalorder %s52, %s55
      %p61 = scmp.eq.s32.totalorder %s21, 0
      %p62 = por %p60, %p61
      %p63 = scmp.ne.s32.totalorder %s52, %s55
      %p64 = scmp.eq.s32.totalorder %s26, 7
      %p65 = por %p63, %p64
      %p66 = scmp.ne.s32.totalorder %s55, %s56
      %p67 = scmp.eq.s32.totalorder %s26, 0
      %p68 = por %p66, %p67
      %p69 = scmp.ne.s32.totalorder %s55, %s56
      %p70 = scmp.eq.s32.totalorder %s27, 7
      %p71 = por %p69, %p70
      %p73 = scmp.ne.s32.totalorder %s56, %s72
      %p74 = scmp.eq.s32.totalorder %s27, 0
      %p75 = por %p73, %p74
      %s76 = ssub.s32 %s30, %s39
      %p77 = scmp.eq.s32.totalorder %s76, 0
      %s79 = sadd.s32 %s78, 1
      %s80 = scalar_select %p77, %s78, %s79
      %p83 = pneg %p77
      %p84 = scmp.eq.s32.totalorder %s21, 7
      %p85 = por %p83, %p84
      %p86 = scmp.ne.s32.totalorder %s78, %s81
      %p87 = scmp.eq.s32.totalorder %s21, 0
      %p88 = por %p86, %p87
      %p89 = scmp.ne.s32.totalorder %s78, %s81
      %p90 = scmp.eq.s32.totalorder %s26, 7
      %p91 = por %p89, %p90
      %p92 = scmp.ne.s32.totalorder %s81, %s82
      %p93 = scmp.eq.s32.totalorder %s26, 0
      %p94 = por %p92, %p93
      %p95 = scmp.ne.s32.totalorder %s81, %s82
      %p96 = scmp.eq.s32.totalorder %s27, 7
      %p97 = por %p95, %p96
      %p99 = scmp.ne.s32.totalorder %s82, %s98
      %p100 = scmp.eq.s32.totalorder %s27, 0
      %p101 = por %p99, %p100
      %s102 = ssub.s32 %s30, %s39
      %p103 = scmp.eq.s32.totalorder %s102, 0
      %s105 = sadd.s32 %s104, 1
      %s106 = scalar_select %p103, %s104, %s105
      %p109 = pneg %p103
      %p110 = scmp.eq.s32.totalorder %s21, 7
      %p111 = por %p109, %p110
      %p112 = scmp.ne.s32.totalorder %s104, %s107
      %p113 = scmp.eq.s32.totalorder %s21, 0
      %p114 = por %p112, %p113
      %p115 = scmp.ne.s32.totalorder %s104, %s107
      %p116 = scmp.eq.s32.totalorder %s26, 7
      %p117 = por %p115, %p116
      %p118 = scmp.ne.s32.totalorder %s107, %s108
      %p119 = scmp.eq.s32.totalorder %s26, 0
      %p120 = por %p118, %p119
      %p121 = scmp.ne.s32.totalorder %s107, %s108
      %p122 = scmp.eq.s32.totalorder %s27, 7
      %p123 = por %p121, %p122
      %p125 = scmp.ne.s32.totalorder %s108, %s124
      %p126 = scmp.eq.s32.totalorder %s27, 0
      %p127 = por %p125, %p126
      %s129 = sadd.s32 %s128, 1
      %p132 = scmp.eq.s32.totalorder %s21, 7
      %p133 = scmp.ne.s32.totalorder %s128, %s130
      %p134 = scmp.eq.s32.totalorder %s21, 0
      %p135 = por %p133, %p134
      %p136 = scmp.ne.s32.totalorder %s128, %s130
      %p137 = scmp.eq.s32.totalorder %s26, 7
      %p138 = por %p136, %p137
      %p139 = scmp.ne.s32.totalorder %s130, %s131
      %p140 = scmp.eq.s32.totalorder %s26, 0
      %p141 = por %p139, %p140
      %p142 = scmp.ne.s32.totalorder %s130, %s131
      %p143 = scmp.eq.s32.totalorder %s27, 7
      %p144 = por %p142, %p143
      %p146 = scmp.ne.s32.totalorder %s131, %s145
      %p147 = scmp.eq.s32.totalorder %s27, 0
      %p148 = por %p146, %p147
      %s150 = sadd.s32 %s149, 1
      %p153 = scmp.eq.s32.totalorder %s21, 7
      %p154 = scmp.ne.s32.totalorder %s149, %s151
      %p155 = scmp.eq.s32.totalorder %s21, 0
      %p156 = por %p154, %p155
      %p157 = scmp.ne.s32.totalorder %s149, %s151
      %p158 = scmp.eq.s32.totalorder %s26, 7
      %p159 = por %p157, %p158
      %p160 = scmp.ne.s32.totalorder %s151, %s152
      %p161 = scmp.eq.s32.totalorder %s26, 0
      %p162 = por %p160, %p161
      %p163 = scmp.ne.s32.totalorder %s151, %s152
      %p164 = scmp.eq.s32.totalorder %s27, 7
      %p165 = por %p163, %p164
      %p167 = scmp.ne.s32.totalorder %s152, %s166
      %p168 = scmp.eq.s32.totalorder %s27, 0
      %p169 = por %p167, %p168
      %s170 = ssub.s32 %s28, %s47
      %s171 = ssub.s32 %s29, %s43
      %s172 = sor.u32 %s170, %s171
      %s173 = ssub.s32 %s30, %s39
      %s174 = sor.u32 %s172, %s173
      %p175 = scmp.eq.s32.totalorder %s174, 0
      %s177 = sadd.s32 %s176, 1
      %s178 = scalar_select %p175, %s176, %s177
      %p181 = pneg %p175
      %p182 = scmp.eq.s32.totalorder %s21, 7
      %p183 = por %p181, %p182
      %p184 = scmp.ne.s32.totalorder %s176, %s179
      %p185 = scmp.eq.s32.totalorder %s21, 0
      %p186 = por %p184, %p185
      %p187 = scmp.ne.s32.totalorder %s176, %s179
      %p188 = scmp.eq.s32.totalorder %s26, 7
      %p189 = por %p187, %p188
      %p190 = scmp.ne.s32.totalorder %s179, %s180
      %p191 = scmp.eq.s32.totalorder %s26, 0
      %p192 = por %p190, %p191
      %p193 = scmp.ne.s32.totalorder %s179, %s180
      %p194 = scmp.eq.s32.totalorder %s27, 7
      %p195 = por %p193, %p194
      %p197 = scmp.ne.s32.totalorder %s180, %s196
      %p198 = scmp.eq.s32.totalorder %s27, 0
      %p199 = por %p197, %p198
      %p200 = scmp.le.s32.totalorder 1, %s21
      %p201 = scmp.lt.s32.totalorder %s21, 9
      %p202 = pnand %p200, %p201
      %p203 = pneg %p202
      // Predicated region
      $region9: #{tpu_custom_call.1} parent=5 // pred_check
        _
      $region10: #{tpu_custom_call.1} parent=5 // pred_check_branch
        %205 = sbr.rel (%p202) target = $region12
      $region11: #{tpu_custom_call.1} parent=5 // pred_region
        %s206 = ssub.s32 %s21, 1
        // Predicated region
        $region13: #{tpu_custom_call.1} parent=11 // pred_check
          %p207 = pneg %p141
        $region14: #{tpu_custom_call.1} parent=11 // pred_check_branch
          %209 = sbr.rel (%p207) target = $region16
        $region15: #{tpu_custom_call.1} parent=11 // pred_region
          %s211 = ssub.s32 32, 32
          %212 = vsyncadd [#allocation10], %s211
          %s214 = sshll.u32 [#allocation9], 4
          %s215 = int_to_ptr.vmem [resolvable:$true] %s214
          %217 = dma.hbm_to_vmem [thread:$0]  %s3, 32, %s215, [#allocation10]
        $region16: #{tpu_custom_call.1} parent=11 // pred_fallthru
          _
        // Predicated region
        $region17: #{tpu_custom_call.1} parent=11 // pred_check
          %p218 = pneg %p162
        $region18: #{tpu_custom_call.1} parent=11 // pred_check_branch
          %220 = sbr.rel (%p218) target = $region20
        $region19: #{tpu_custom_call.1} parent=11 // pred_region
          %s222 = ssub.s32 32, 32
          %223 = vsyncadd [#allocation10], %s222
          %s225 = sshll.u32 [#allocation11], 4
          %s226 = int_to_ptr.vmem [resolvable:$true] %s225
          %228 = dma.hbm_to_vmem [thread:$0]  %s4, 32, %s226, [#allocation10]
        $region20: #{tpu_custom_call.1} parent=11 // pred_fallthru
          _
      $region12: #{tpu_custom_call.1} parent=5 // pred_fallthru
        _
      %p229 = scmp.lt.s32.totalorder %s21, 8
      // Predicated region
      $region21: #{tpu_custom_call.1} parent=5 // pred_check
        %p230 = pneg %p229
      $region22: #{tpu_custom_call.1} parent=5 // pred_check_branch
        %232 = sbr.rel (%p230) target = $region24
      $region23: #{tpu_custom_call.1} parent=5 // pred_region
        // Predicated region
        $region25: #{tpu_custom_call.1} parent=23 // pred_check
          %p233 = pneg %p62
        $region26: #{tpu_custom_call.1} parent=23 // pred_check_branch
          %235 = sbr.rel (%p233) target = $region28
        $region27: #{tpu_custom_call.1} parent=23 // pred_region
          %s236 = sand.u32 %s52, 1
          %s237 = scalar_lea.sflag [#allocation4], %s236
          %s238 = sand.u32 %s52, 1
          %s239 = smul.addr %s238, 512
          %s240 = scalar_lea.vmem [#allocation3], %s239
          %s241 = smul.u32 32, %s29
          %s243 = ssub.s32 8192, 8192
          %244 = vsyncadd %s237, %s243
          %s245 = smul.addr %s241, 2
          %s246 = smul.addr %s28, 128
          %s247 = sadd.s32 %s245, %s246
          %s248 = smul.addr %s247, 128
          %s249 = scalar_lea.hbm %s0, %s248
          %s250 = sshll.u32 %s240, 4
          %s251 = int_to_ptr.vmem [resolvable:$true] %s250
          %256 = dma.hbm_to_vmem [thread:$0]  %s249, 8192, %s251, %s237, 256, 256, 16
        $region28: #{tpu_custom_call.1} parent=23 // pred_fallthru
          _
        // Predicated region
        $region29: #{tpu_custom_call.1} parent=23 // pred_check
          %p257 = pneg %p88
        $region30: #{tpu_custom_call.1} parent=23 // pred_check_branch
          %259 = sbr.rel (%p257) target = $region32
        $region31: #{tpu_custom_call.1} parent=23 // pred_region
          %s260 = sand.u32 %s21, 1
          %s261 = scalar_lea.sflag [#allocation7], %s260
          %s262 = sand.u32 %s78, 1
          %s263 = smul.addr %s262, 256
          %s264 = scalar_lea.vmem [#allocation6], %s263
          %s265 = smul.u32 2, %s30
          %s267 = ssub.s32 4096, 4096
          %268 = vsyncadd %s261, %s267
          %s269 = smul.addr %s265, 64
          %s270 = scalar_lea.hbm %s1, %s269
          %s271 = sshll.u32 %s264, 4
          %s272 = int_to_ptr.vmem [resolvable:$true] %s271
          %277 = dma.hbm_to_vmem [thread:$0]  %s270, 4096, %s272, %s261, 256, 128, 8
        $region32: #{tpu_custom_call.1} parent=23 // pred_fallthru
          _
        // Predicated region
        $region33: #{tpu_custom_call.1} parent=23 // pred_check
          %p278 = pneg %p114
        $region34: #{tpu_custom_call.1} parent=23 // pred_check_branch
          %280 = sbr.rel (%p278) target = $region36
        $region35: #{tpu_custom_call.1} parent=23 // pred_region
          %s281 = sand.u32 %s21, 1
          %s282 = scalar_lea.sflag [#allocation7], %s281
          %s283 = sand.u32 %s104, 1
          %s284 = smul.addr %s283, 2
          %s285 = scalar_lea.vmem [#allocation8], %s284
          %s286 = smul.u32 2, %s30
          %s288 = ssub.s32 32, 32
          %289 = vsyncadd %s282, %s288
          %s290 = smul.addr %s286, 16
          %s291 = scalar_lea.hbm %s2, %s290
          %s293 = sshll.u32 %s285, 4
          %s294 = int_to_ptr.vmem [resolvable:$true] %s293
          %296 = dma.hbm_to_vmem [thread:$0]  %s291, 32, %s294, %s282
        $region36: #{tpu_custom_call.1} parent=23 // pred_fallthru
          _
      $region24: #{tpu_custom_call.1} parent=5 // pred_fallthru
        _
      %p297 = scmp.le.s32.totalorder 1, %s21
      %p298 = scmp.lt.s32.totalorder %s21, 9
      %p299 = pnand %p297, %p298
      %p300 = pneg %p299
      // Predicated region
      $region37: #{tpu_custom_call.1} parent=5 // pred_check
        _
      $region38: #{tpu_custom_call.1} parent=5 // pred_check_branch
        %302 = sbr.rel (%p299) target = $region40
      $region39: #{tpu_custom_call.1} parent=5 // pred_region
        %s303 = ssub.s32 %s21, 1
        %s304 = sand.u32 %s55, 1
        %s305 = scalar_lea.sflag [#allocation4], %s304
        %s306 = sand.u32 %s55, 1
        %s307 = smul.addr %s306, 512
        %s308 = scalar_lea.vmem [#allocation3], %s307
        // Predicated region
        $region41: #{tpu_custom_call.1} parent=39 // pred_check
          %p309 = pneg %p68
        $region42: #{tpu_custom_call.1} parent=39 // pred_check_branch
          %311 = sbr.rel (%p309) target = $region44
        $region43: #{tpu_custom_call.1} parent=39 // pred_region
          %312 = dma.done %s305, 8192
        $region44: #{tpu_custom_call.1} parent=39 // pred_fallthru
          _
        %s313 = sand.u32 %s26, 1
        %s314 = scalar_lea.sflag [#allocation7], %s313
        %s315 = sand.u32 %s81, 1
        %s316 = smul.addr %s315, 256
        %s317 = scalar_lea.vmem [#allocation6], %s316
        // Predicated region
        $region45: #{tpu_custom_call.1} parent=39 // pred_check
          %p318 = pneg %p94
        $region46: #{tpu_custom_call.1} parent=39 // pred_check_branch
          %320 = sbr.rel (%p318) target = $region48
        $region47: #{tpu_custom_call.1} parent=39 // pred_region
          %321 = dma.done %s314, 4096
        $region48: #{tpu_custom_call.1} parent=39 // pred_fallthru
          _
        %s322 = sand.u32 %s26, 1
        %s323 = scalar_lea.sflag [#allocation7], %s322
        %s324 = sand.u32 %s107, 1
        %s325 = smul.addr %s324, 2
        %s326 = scalar_lea.vmem [#allocation8], %s325
        // Predicated region
        $region49: #{tpu_custom_call.1} parent=39 // pred_check
          %p327 = pneg %p120
        $region50: #{tpu_custom_call.1} parent=39 // pred_check_branch
          %329 = sbr.rel (%p327) target = $region52
        $region51: #{tpu_custom_call.1} parent=39 // pred_region
          %330 = dma.done %s323, 32
        $region52: #{tpu_custom_call.1} parent=39 // pred_fallthru
          _
        // Predicated region
        $region53: #{tpu_custom_call.1} parent=39 // pred_check
          %p331 = pneg %p141
        $region54: #{tpu_custom_call.1} parent=39 // pred_check_branch
          %333 = sbr.rel (%p331) target = $region56
        $region55: #{tpu_custom_call.1} parent=39 // pred_region
          %334 = dma.done [#allocation10], 32
        $region56: #{tpu_custom_call.1} parent=39 // pred_fallthru
          _
        // Predicated region
        $region57: #{tpu_custom_call.1} parent=39 // pred_check
          %p335 = pneg %p162
        $region58: #{tpu_custom_call.1} parent=39 // pred_check_branch
          %337 = sbr.rel (%p335) target = $region60
        $region59: #{tpu_custom_call.1} parent=39 // pred_region
          %338 = dma.done [#allocation10], 32
        $region60: #{tpu_custom_call.1} parent=39 // pred_fallthru
          _
        %s339 = sand.u32 %s55, 1
        %s340 = scalar_lea.sflag [#allocation4], %s339
        %s341 = sand.u32 %s55, 1
        %s342 = smul.addr %s341, 512
        %s343 = scalar_lea.vmem [#allocation3], %s342
        %p344 = pneg %p68
        %p345 = pneg %p65
        %s346 = sand.u32 %s26, 1
        %s347 = scalar_lea.sflag [#allocation7], %s346
        %s348 = sand.u32 %s81, 1
        %s349 = smul.addr %s348, 256
        %s350 = scalar_lea.vmem [#allocation6], %s349
        %p351 = pneg %p94
        %p352 = pneg %p91
        %s353 = sand.u32 %s26, 1
        %s354 = scalar_lea.sflag [#allocation7], %s353
        %s355 = sand.u32 %s107, 1
        %s356 = smul.addr %s355, 2
        %s357 = scalar_lea.vmem [#allocation8], %s356
        %p358 = pneg %p120
        %p359 = pneg %p117
        %p360 = pneg %p141
        %p361 = pneg %p138
        %p362 = pneg %p162
        %p363 = pneg %p159
        %p364 = pneg %p192
        %p365 = pneg %p189
        %s366 = sand.u32 %s179, 1
        %s367 = scalar_lea.sflag [#allocation5], %s366
        %s368 = sand.u32 %s179, 1
        %s369 = smul.addr %s368, 256
        %s370 = scalar_lea.vmem [#allocation12], %s369
        %s371 = smul.u32 32, %s32
        %s372 = smul.u32 2, %s33
        %s373 = smul.u32 2, %s33
        %s374 = smul.u32 32, %s32
        %s375 = smul.u32 2, %s33
        %p376 = scmp.eq.s32.totalorder %s33, 0
        // Predicated region
        $region61: #{tpu_custom_call.1} parent=39 // pred_check
          %p377 = pneg %p376
        $region62: #{tpu_custom_call.1} parent=39 // pred_check_branch
          %379 = sbr.rel (%p377) target = $region64
        $region63: #{tpu_custom_call.1} parent=39 // pred_region
          %v380 = vld [vmem:[%s308] sm:$0xff]
          %v381 = vld [vmem:[%s308 + $0x8] sm:$0xff]
          %v382 = vld [vmem:[%s308 + $0x10] sm:$0xff]
          %v383 = vld [vmem:[%s308 + $0x18] sm:$0xff]
          %v384 = vld [vmem:[%s308 + $0x20] sm:$0xff]
          %v385 = vld [vmem:[%s308 + $0x28] sm:$0xff]
          %v386 = vld [vmem:[%s308 + $0x30] sm:$0xff]
          %v387 = vld [vmem:[%s308 + $0x38] sm:$0xff]
          %v388 = vld [vmem:[%s308 + $0x40] sm:$0xff]
          %v389 = vld [vmem:[%s308 + $0x48] sm:$0xff]
          %v390 = vld [vmem:[%s308 + $0x50] sm:$0xff]
          %v391 = vld [vmem:[%s308 + $0x58] sm:$0xff]
          %v392 = vld [vmem:[%s308 + $0x60] sm:$0xff]
          %v393 = vld [vmem:[%s308 + $0x68] sm:$0xff]
          %v394 = vld [vmem:[%s308 + $0x70] sm:$0xff]
          %v395 = vld [vmem:[%s308 + $0x78] sm:$0xff]
          %v396 = vld [vmem:[%s308 + $0x80] sm:$0xff]
          %v397 = vld [vmem:[%s308 + $0x88] sm:$0xff]
          %v398 = vld [vmem:[%s308 + $0x90] sm:$0xff]
          %v399 = vld [vmem:[%s308 + $0x98] sm:$0xff]
          %v400 = vld [vmem:[%s308 + $0xa0] sm:$0xff]
          %v401 = vld [vmem:[%s308 + $0xa8] sm:$0xff]
          %v402 = vld [vmem:[%s308 + $0xb0] sm:$0xff]
          %v403 = vld [vmem:[%s308 + $0xb8] sm:$0xff]
          %v404 = vld [vmem:[%s308 + $0xc0] sm:$0xff]
          %v405 = vld [vmem:[%s308 + $0xc8] sm:$0xff]
          %v406 = vld [vmem:[%s308 + $0xd0] sm:$0xff]
          %v407 = vld [vmem:[%s308 + $0xd8] sm:$0xff]
          %v408 = vld [vmem:[%s308 + $0xe0] sm:$0xff]
          %v409 = vld [vmem:[%s308 + $0xe8] sm:$0xff]
          %v410 = vld [vmem:[%s308 + $0xf0] sm:$0xff]
          %v411 = vld [vmem:[%s308 + $0xf8] sm:$0xff]
          %v412 = vld [vmem:[%s308 + $0x100] sm:$0xff]
          %v413 = vld [vmem:[%s308 + $0x108] sm:$0xff]
          %v414 = vld [vmem:[%s308 + $0x110] sm:$0xff]
          %v415 = vld [vmem:[%s308 + $0x118] sm:$0xff]
          %v416 = vld [vmem:[%s308 + $0x120] sm:$0xff]
          %v417 = vld [vmem:[%s308 + $0x128] sm:$0xff]
          %v418 = vld [vmem:[%s308 + $0x130] sm:$0xff]
          %v419 = vld [vmem:[%s308 + $0x138] sm:$0xff]
          %v420 = vld [vmem:[%s308 + $0x140] sm:$0xff]
          %v421 = vld [vmem:[%s308 + $0x148] sm:$0xff]
          %v422 = vld [vmem:[%s308 + $0x150] sm:$0xff]
          %v423 = vld [vmem:[%s308 + $0x158] sm:$0xff]
          %v424 = vld [vmem:[%s308 + $0x160] sm:$0xff]
          %v425 = vld [vmem:[%s308 + $0x168] sm:$0xff]
          %v426 = vld [vmem:[%s308 + $0x170] sm:$0xff]
          %v427 = vld [vmem:[%s308 + $0x178] sm:$0xff]
          %v428 = vld [vmem:[%s308 + $0x180] sm:$0xff]
          %v429 = vld [vmem:[%s308 + $0x188] sm:$0xff]
          %v430 = vld [vmem:[%s308 + $0x190] sm:$0xff]
          %v431 = vld [vmem:[%s308 + $0x198] sm:$0xff]
          %v432 = vld [vmem:[%s308 + $0x1a0] sm:$0xff]
          %v433 = vld [vmem:[%s308 + $0x1a8] sm:$0xff]
          %v434 = vld [vmem:[%s308 + $0x1b0] sm:$0xff]
          %v435 = vld [vmem:[%s308 + $0x1b8] sm:$0xff]
          %v436 = vld [vmem:[%s308 + $0x1c0] sm:$0xff]
          %v437 = vld [vmem:[%s308 + $0x1c8] sm:$0xff]
          %v438 = vld [vmem:[%s308 + $0x1d0] sm:$0xff]
          %v439 = vld [vmem:[%s308 + $0x1d8] sm:$0xff]
          %v440 = vld [vmem:[%s308 + $0x1e0] sm:$0xff]
          %v441 = vld [vmem:[%s308 + $0x1e8] sm:$0xff]
          %v442 = vld [vmem:[%s308 + $0x1f0] sm:$0xff]
          %v443 = vld [vmem:[%s308 + $0x1f8] sm:$0xff]
          %v444 = vld [vmem:[#allocation9] sm:$0x3]
          %v445 = vld [vmem:[#allocation11] sm:$0x3]
          %v446 = vadd.f32 %v380, %v381
          %447 = vadd.xlane.f32.xlu0 %v446
          %v448 = vpop.xlane.xlu0 %447
          %v449 = vadd.f32 %v382, %v383
          %450 = vadd.xlane.f32.xlu0 %v449
          %v451 = vpop.xlane.xlu0 %450
          %v452 = vadd.f32 %v384, %v385
          %453 = vadd.xlane.f32.xlu0 %v452
          %v454 = vpop.xlane.xlu0 %453
          %v455 = vadd.f32 %v386, %v387
          %456 = vadd.xlane.f32.xlu0 %v455
          %v457 = vpop.xlane.xlu0 %456
          %v458 = vadd.f32 %v388, %v389
          %459 = vadd.xlane.f32.xlu0 %v458
          %v460 = vpop.xlane.xlu0 %459
          %v461 = vadd.f32 %v390, %v391
          %462 = vadd.xlane.f32.xlu0 %v461
          %v463 = vpop.xlane.xlu0 %462
          %v464 = vadd.f32 %v392, %v393
          %465 = vadd.xlane.f32.xlu0 %v464
          %v466 = vpop.xlane.xlu0 %465
          %v467 = vadd.f32 %v394, %v395
          %468 = vadd.xlane.f32.xlu0 %v467
          %v469 = vpop.xlane.xlu0 %468
          %v470 = vadd.f32 %v396, %v397
          %471 = vadd.xlane.f32.xlu0 %v470
          %v472 = vpop.xlane.xlu0 %471
          %v473 = vadd.f32 %v398, %v399
          %474 = vadd.xlane.f32.xlu0 %v473
          %v475 = vpop.xlane.xlu0 %474
          %v476 = vadd.f32 %v400, %v401
          %477 = vadd.xlane.f32.xlu0 %v476
          %v478 = vpop.xlane.xlu0 %477
          %v479 = vadd.f32 %v402, %v403
          %480 = vadd.xlane.f32.xlu0 %v479
          %v481 = vpop.xlane.xlu0 %480
          %v482 = vadd.f32 %v404, %v405
          %483 = vadd.xlane.f32.xlu0 %v482
          %v484 = vpop.xlane.xlu0 %483
          %v485 = vadd.f32 %v406, %v407
          %486 = vadd.xlane.f32.xlu0 %v485
          %v487 = vpop.xlane.xlu0 %486
          %v488 = vadd.f32 %v408, %v409
          %489 = vadd.xlane.f32.xlu0 %v488
          %v490 = vpop.xlane.xlu0 %489
          %v491 = vadd.f32 %v410, %v411
          %492 = vadd.xlane.f32.xlu0 %v491
          %v493 = vpop.xlane.xlu0 %492
          %v494 = vadd.f32 %v412, %v413
          %495 = vadd.xlane.f32.xlu0 %v494
          %v496 = vpop.xlane.xlu0 %495
          %v497 = vadd.f32 %v414, %v415
          %498 = vadd.xlane.f32.xlu0 %v497
          %v499 = vpop.xlane.xlu0 %498
          %v500 = vadd.f32 %v416, %v417
          %501 = vadd.xlane.f32.xlu0 %v500
          %v502 = vpop.xlane.xlu0 %501
          %v503 = vadd.f32 %v418, %v419
          %504 = vadd.xlane.f32.xlu0 %v503
          %v505 = vpop.xlane.xlu0 %504
          %v506 = vadd.f32 %v420, %v421
          %507 = vadd.xlane.f32.xlu0 %v506
          %v508 = vpop.xlane.xlu0 %507
          %v509 = vadd.f32 %v422, %v423
          %510 = vadd.xlane.f32.xlu0 %v509
          %v511 = vpop.xlane.xlu0 %510
          %v512 = vadd.f32 %v424, %v425
          %513 = vadd.xlane.f32.xlu0 %v512
          %v514 = vpop.xlane.xlu0 %513
          %v515 = vadd.f32 %v426, %v427
          %516 = vadd.xlane.f32.xlu0 %v515
          %v517 = vpop.xlane.xlu0 %516
          %v518 = vadd.f32 %v428, %v429
          %519 = vadd.xlane.f32.xlu0 %v518
          %v520 = vpop.xlane.xlu0 %519
          %v521 = vadd.f32 %v430, %v431
          %522 = vadd.xlane.f32.xlu0 %v521
          %v523 = vpop.xlane.xlu0 %522
          %v524 = vadd.f32 %v432, %v433
          %525 = vadd.xlane.f32.xlu0 %v524
          %v526 = vpop.xlane.xlu0 %525
          %v527 = vadd.f32 %v434, %v435
          %528 = vadd.xlane.f32.xlu0 %v527
          %v529 = vpop.xlane.xlu0 %528
          %v530 = vadd.f32 %v436, %v437
          %531 = vadd.xlane.f32.xlu0 %v530
          %v532 = vpop.xlane.xlu0 %531
          %v533 = vadd.f32 %v438, %v439
          %534 = vadd.xlane.f32.xlu0 %v533
          %v535 = vpop.xlane.xlu0 %534
          %v536 = vadd.f32 %v440, %v441
          %537 = vadd.xlane.f32.xlu0 %v536
          %v538 = vpop.xlane.xlu0 %537
          %v539 = vadd.f32 %v442, %v443
          %540 = vadd.xlane.f32.xlu0 %v539
          %v541 = vpop.xlane.xlu0 %540
          %v542 = vrcp.pop 256.0
          %v543 = vmul.f32 %v448, %v542
          %v544 = vmul.f32 %v451, %v542
          %v545 = vmul.f32 %v454, %v542
          %v546 = vmul.f32 %v457, %v542
          %v547 = vmul.f32 %v460, %v542
          %v548 = vmul.f32 %v463, %v542
          %v549 = vmul.f32 %v466, %v542
          %v550 = vmul.f32 %v469, %v542
          %v551 = vmul.f32 %v472, %v542
          %v552 = vmul.f32 %v475, %v542
          %v553 = vmul.f32 %v478, %v542
          %v554 = vmul.f32 %v481, %v542
          %v555 = vmul.f32 %v484, %v542
          %v556 = vmul.f32 %v487, %v542
          %v557 = vmul.f32 %v490, %v542
          %v558 = vmul.f32 %v493, %v542
          %v559 = vmul.f32 %v496, %v542
          %v560 = vmul.f32 %v499, %v542
          %v561 = vmul.f32 %v502, %v542
          %v562 = vmul.f32 %v505, %v542
          %v563 = vmul.f32 %v508, %v542
          %v564 = vmul.f32 %v511, %v542
          %v565 = vmul.f32 %v514, %v542
          %v566 = vmul.f32 %v517, %v542
          %v567 = vmul.f32 %v520, %v542
          %v568 = vmul.f32 %v523, %v542
          %v569 = vmul.f32 %v526, %v542
          %v570 = vmul.f32 %v529, %v542
          %v571 = vmul.f32 %v532, %v542
          %v572 = vmul.f32 %v535, %v542
          %v573 = vmul.f32 %v538, %v542
          %v574 = vmul.f32 %v541, %v542
          %v575 = vsub.f32 %v380, %v543
          %v576 = vsub.f32 %v381, %v543
          %v577 = vsub.f32 %v382, %v544
          %v578 = vsub.f32 %v383, %v544
          %v579 = vsub.f32 %v384, %v545
          %v580 = vsub.f32 %v385, %v545
          %v581 = vsub.f32 %v386, %v546
          %v582 = vsub.f32 %v387, %v546
          %v583 = vsub.f32 %v388, %v547
          %v584 = vsub.f32 %v389, %v547
          %v585 = vsub.f32 %v390, %v548
          %v586 = vsub.f32 %v391, %v548
          %v587 = vsub.f32 %v392, %v549
          %v588 = vsub.f32 %v393, %v549
          %v589 = vsub.f32 %v394, %v550
          %v590 = vsub.f32 %v395, %v550
          %v591 = vsub.f32 %v396, %v551
          %v592 = vsub.f32 %v397, %v551
          %v593 = vsub.f32 %v398, %v552
          %v594 = vsub.f32 %v399, %v552
          %v595 = vsub.f32 %v400, %v553
          %v596 = vsub.f32 %v401, %v553
          %v597 = vsub.f32 %v402, %v554
          %v598 = vsub.f32 %v403, %v554
          %v599 = vsub.f32 %v404, %v555
          %v600 = vsub.f32 %v405, %v555
          %v601 = vsub.f32 %v406, %v556
          %v602 = vsub.f32 %v407, %v556
          %v603 = vsub.f32 %v408, %v557
          %v604 = vsub.f32 %v409, %v557
          %v605 = vsub.f32 %v410, %v558
          %v606 = vsub.f32 %v411, %v558
          %v607 = vsub.f32 %v412, %v559
          %v608 = vsub.f32 %v413, %v559
          %v609 = vsub.f32 %v414, %v560
          %v610 = vsub.f32 %v415, %v560
          %v611 = vsub.f32 %v416, %v561
          %v612 = vsub.f32 %v417, %v561
          %v613 = vsub.f32 %v418, %v562
          %v614 = vsub.f32 %v419, %v562
          %v615 = vsub.f32 %v420, %v563
          %v616 = vsub.f32 %v421, %v563
          %v617 = vsub.f32 %v422, %v564
          %v618 = vsub.f32 %v423, %v564
          %v619 = vsub.f32 %v424, %v565
          %v620 = vsub.f32 %v425, %v565
          %v621 = vsub.f32 %v426, %v566
          %v622 = vsub.f32 %v427, %v566
          %v623 = vsub.f32 %v428, %v567
          %v624 = vsub.f32 %v429, %v567
          %v625 = vsub.f32 %v430, %v568
          %v626 = vsub.f32 %v431, %v568
          %v627 = vsub.f32 %v432, %v569
          %v628 = vsub.f32 %v433, %v569
          %v629 = vsub.f32 %v434, %v570
          %v630 = vsub.f32 %v435, %v570
          %v631 = vsub.f32 %v436, %v571
          %v632 = vsub.f32 %v437, %v571
          %v633 = vsub.f32 %v438, %v572
          %v634 = vsub.f32 %v439, %v572
          %v635 = vsub.f32 %v440, %v573
          %v636 = vsub.f32 %v441, %v573
          %v637 = vsub.f32 %v442, %v574
          %v638 = vsub.f32 %v443, %v574
          %v639 = vmul.f32 %v575, %v575
          %v640 = vmul.f32 %v576, %v576
          %v641 = vmul.f32 %v577, %v577
          %v642 = vmul.f32 %v578, %v578
          %v643 = vmul.f32 %v579, %v579
          %v644 = vmul.f32 %v580, %v580
          %v645 = vmul.f32 %v581, %v581
          %v646 = vmul.f32 %v582, %v582
          %v647 = vmul.f32 %v583, %v583
          %v648 = vmul.f32 %v584, %v584
          %v649 = vmul.f32 %v585, %v585
          %v650 = vmul.f32 %v586, %v586
          %v651 = vmul.f32 %v587, %v587
          %v652 = vmul.f32 %v588, %v588
          %v653 = vmul.f32 %v589, %v589
          %v654 = vmul.f32 %v590, %v590
          %v655 = vmul.f32 %v591, %v591
          %v656 = vmul.f32 %v592, %v592
          %v657 = vmul.f32 %v593, %v593
          %v658 = vmul.f32 %v594, %v594
          %v659 = vmul.f32 %v595, %v595
          %v660 = vmul.f32 %v596, %v596
          %v661 = vmul.f32 %v597, %v597
          %v662 = vmul.f32 %v598, %v598
          %v663 = vmul.f32 %v599, %v599
          %v664 = vmul.f32 %v600, %v600
          %v665 = vmul.f32 %v601, %v601
          %v666 = vmul.f32 %v602, %v602
          %v667 = vmul.f32 %v603, %v603
          %v668 = vmul.f32 %v604, %v604
          %v669 = vmul.f32 %v605, %v605
          %v670 = vmul.f32 %v606, %v606
          %v671 = vmul.f32 %v607, %v607
          %v672 = vmul.f32 %v608, %v608
          %v673 = vmul.f32 %v609, %v609
          %v674 = vmul.f32 %v610, %v610
          %v675 = vmul.f32 %v611, %v611
          %v676 = vmul.f32 %v612, %v612
          %v677 = vmul.f32 %v613, %v613
          %v678 = vmul.f32 %v614, %v614
          %v679 = vmul.f32 %v615, %v615
          %v680 = vmul.f32 %v616, %v616
          %v681 = vmul.f32 %v617, %v617
          %v682 = vmul.f32 %v618, %v618
          %v683 = vmul.f32 %v619, %v619
          %v684 = vmul.f32 %v620, %v620
          %v685 = vmul.f32 %v621, %v621
          %v686 = vmul.f32 %v622, %v622
          %v687 = vmul.f32 %v623, %v623
          %v688 = vmul.f32 %v624, %v624
          %v689 = vmul.f32 %v625, %v625
          %v690 = vmul.f32 %v626, %v626
          %v691 = vmul.f32 %v627, %v627
          %v692 = vmul.f32 %v628, %v628
          %v693 = vmul.f32 %v629, %v629
          %v694 = vmul.f32 %v630, %v630
          %v695 = vmul.f32 %v631, %v631
          %v696 = vmul.f32 %v632, %v632
          %v697 = vmul.f32 %v633, %v633
          %v698 = vmul.f32 %v634, %v634
          %v699 = vmul.f32 %v635, %v635
          %v700 = vmul.f32 %v636, %v636
          %v701 = vmul.f32 %v637, %v637
          %v702 = vmul.f32 %v638, %v638
          %v703 = vadd.f32 %v639, %v640
          %704 = vadd.xlane.f32.xlu0 %v703
          %v705 = vpop.xlane.xlu0 %704
          %v706 = vadd.f32 %v641, %v642
          %707 = vadd.xlane.f32.xlu0 %v706
          %v708 = vpop.xlane.xlu0 %707
          %v709 = vadd.f32 %v643, %v644
          %710 = vadd.xlane.f32.xlu0 %v709
          %v711 = vpop.xlane.xlu0 %710
          %v712 = vadd.f32 %v645, %v646
          %713 = vadd.xlane.f32.xlu0 %v712
          %v714 = vpop.xlane.xlu0 %713
          %v715 = vadd.f32 %v647, %v648
          %716 = vadd.xlane.f32.xlu0 %v715
          %v717 = vpop.xlane.xlu0 %716
          %v718 = vadd.f32 %v649, %v650
          %719 = vadd.xlane.f32.xlu0 %v718
          %v720 = vpop.xlane.xlu0 %719
          %v721 = vadd.f32 %v651, %v652
          %722 = vadd.xlane.f32.xlu0 %v721
          %v723 = vpop.xlane.xlu0 %722
          %v724 = vadd.f32 %v653, %v654
          %725 = vadd.xlane.f32.xlu0 %v724
          %v726 = vpop.xlane.xlu0 %725
          %v727 = vadd.f32 %v655, %v656
          %728 = vadd.xlane.f32.xlu0 %v727
          %v729 = vpop.xlane.xlu0 %728
          %v730 = vadd.f32 %v657, %v658
          %731 = vadd.xlane.f32.xlu0 %v730
          %v732 = vpop.xlane.xlu0 %731
          %v733 = vadd.f32 %v659, %v660
          %734 = vadd.xlane.f32.xlu0 %v733
          %v735 = vpop.xlane.xlu0 %734
          %v736 = vadd.f32 %v661, %v662
          %737 = vadd.xlane.f32.xlu0 %v736
          %v738 = vpop.xlane.xlu0 %737
          %v739 = vadd.f32 %v663, %v664
          %740 = vadd.xlane.f32.xlu0 %v739
          %v741 = vpop.xlane.xlu0 %740
          %v742 = vadd.f32 %v665, %v666
          %743 = vadd.xlane.f32.xlu0 %v742
          %v744 = vpop.xlane.xlu0 %743
          %v745 = vadd.f32 %v667, %v668
          %746 = vadd.xlane.f32.xlu0 %v745
          %v747 = vpop.xlane.xlu0 %746
          %v748 = vadd.f32 %v669, %v670
          %749 = vadd.xlane.f32.xlu0 %v748
          %v750 = vpop.xlane.xlu0 %749
          %v751 = vadd.f32 %v671, %v672
          %752 = vadd.xlane.f32.xlu0 %v751
          %v753 = vpop.xlane.xlu0 %752
          %v754 = vadd.f32 %v673, %v674
          %755 = vadd.xlane.f32.xlu0 %v754
          %v756 = vpop.xlane.xlu0 %755
          %v757 = vadd.f32 %v675, %v676
          %758 = vadd.xlane.f32.xlu0 %v757
          %v759 = vpop.xlane.xlu0 %758
          %v760 = vadd.f32 %v677, %v678
          %761 = vadd.xlane.f32.xlu0 %v760
          %v762 = vpop.xlane.xlu0 %761
          %v763 = vadd.f32 %v679, %v680
          %764 = vadd.xlane.f32.xlu0 %v763
          %v765 = vpop.xlane.xlu0 %764
          %v766 = vadd.f32 %v681, %v682
          %767 = vadd.xlane.f32.xlu0 %v766
          %v768 = vpop.xlane.xlu0 %767
          %v769 = vadd.f32 %v683, %v684
          %770 = vadd.xlane.f32.xlu0 %v769
          %v771 = vpop.xlane.xlu0 %770
          %v772 = vadd.f32 %v685, %v686
          %773 = vadd.xlane.f32.xlu0 %v772
          %v774 = vpop.xlane.xlu0 %773
          %v775 = vadd.f32 %v687, %v688
          %776 = vadd.xlane.f32.xlu0 %v775
          %v777 = vpop.xlane.xlu0 %776
          %v778 = vadd.f32 %v689, %v690
          %779 = vadd.xlane.f32.xlu0 %v778
          %v780 = vpop.xlane.xlu0 %779
          %v781 = vadd.f32 %v691, %v692
          %782 = vadd.xlane.f32.xlu0 %v781
          %v783 = vpop.xlane.xlu0 %782
          %v784 = vadd.f32 %v693, %v694
          %785 = vadd.xlane.f32.xlu0 %v784
          %v786 = vpop.xlane.xlu0 %785
          %v787 = vadd.f32 %v695, %v696
          %788 = vadd.xlane.f32.xlu0 %v787
          %v789 = vpop.xlane.xlu0 %788
          %v790 = vadd.f32 %v697, %v698
          %791 = vadd.xlane.f32.xlu0 %v790
          %v792 = vpop.xlane.xlu0 %791
          %v793 = vadd.f32 %v699, %v700
          %794 = vadd.xlane.f32.xlu0 %v793
          %v795 = vpop.xlane.xlu0 %794
          %v796 = vadd.f32 %v701, %v702
          %797 = vadd.xlane.f32.xlu0 %v796
          %v798 = vpop.xlane.xlu0 %797
          %v799 = vmul.f32 %v705, %v542
          %v800 = vmul.f32 %v708, %v542
          %v801 = vmul.f32 %v711, %v542
          %v802 = vmul.f32 %v714, %v542
          %v803 = vmul.f32 %v717, %v542
          %v804 = vmul.f32 %v720, %v542
          %v805 = vmul.f32 %v723, %v542
          %v806 = vmul.f32 %v726, %v542
          %v807 = vmul.f32 %v729, %v542
          %v808 = vmul.f32 %v732, %v542
          %v809 = vmul.f32 %v735, %v542
          %v810 = vmul.f32 %v738, %v542
          %v811 = vmul.f32 %v741, %v542
          %v812 = vmul.f32 %v744, %v542
          %v813 = vmul.f32 %v747, %v542
          %v814 = vmul.f32 %v750, %v542
          %v815 = vmul.f32 %v753, %v542
          %v816 = vmul.f32 %v756, %v542
          %v817 = vmul.f32 %v759, %v542
          %v818 = vmul.f32 %v762, %v542
          %v819 = vmul.f32 %v765, %v542
          %v820 = vmul.f32 %v768, %v542
          %v821 = vmul.f32 %v771, %v542
          %v822 = vmul.f32 %v774, %v542
          %v823 = vmul.f32 %v777, %v542
          %v824 = vmul.f32 %v780, %v542
          %v825 = vmul.f32 %v783, %v542
          %v826 = vmul.f32 %v786, %v542
          %v827 = vmul.f32 %v789, %v542
          %v828 = vmul.f32 %v792, %v542
          %v829 = vmul.f32 %v795, %v542
          %v830 = vmul.f32 %v798, %v542
          %v831 = vadd.f32 %v799, 1e-05
          %v832 = vadd.f32 %v800, 1e-05
          %v833 = vadd.f32 %v801, 1e-05
          %v834 = vadd.f32 %v802, 1e-05
          %v835 = vadd.f32 %v803, 1e-05
          %v836 = vadd.f32 %v804, 1e-05
          %v837 = vadd.f32 %v805, 1e-05
          %v838 = vadd.f32 %v806, 1e-05
          %v839 = vadd.f32 %v807, 1e-05
          %v840 = vadd.f32 %v808, 1e-05
          %v841 = vadd.f32 %v809, 1e-05
          %v842 = vadd.f32 %v810, 1e-05
          %v843 = vadd.f32 %v811, 1e-05
          %v844 = vadd.f32 %v812, 1e-05
          %v845 = vadd.f32 %v813, 1e-05
          %v846 = vadd.f32 %v814, 1e-05
          %v847 = vadd.f32 %v815, 1e-05
          %v848 = vadd.f32 %v816, 1e-05
          %v849 = vadd.f32 %v817, 1e-05
          %v850 = vadd.f32 %v818, 1e-05
          %v851 = vadd.f32 %v819, 1e-05
          %v852 = vadd.f32 %v820, 1e-05
          %v853 = vadd.f32 %v821, 1e-05
          %v854 = vadd.f32 %v822, 1e-05
          %v855 = vadd.f32 %v823, 1e-05
          %v856 = vadd.f32 %v824, 1e-05
          %v857 = vadd.f32 %v825, 1e-05
          %v858 = vadd.f32 %v826, 1e-05
          %v859 = vadd.f32 %v827, 1e-05
          %v860 = vadd.f32 %v828, 1e-05
          %v861 = vadd.f32 %v829, 1e-05
          %v862 = vadd.f32 %v830, 1e-05
          %v863 = vrsqrt.pop %v831
          %v864 = vrsqrt.pop %v832
          %v865 = vrsqrt.pop %v833
          %v866 = vrsqrt.pop %v834
          %v867 = vrsqrt.pop %v835
          %v868 = vrsqrt.pop %v836
          %v869 = vrsqrt.pop %v837
          %v870 = vrsqrt.pop %v838
          %v871 = vrsqrt.pop %v839
          %v872 = vrsqrt.pop %v840
          %v873 = vrsqrt.pop %v841
          %v874 = vrsqrt.pop %v842
          %v875 = vrsqrt.pop %v843
          %v876 = vrsqrt.pop %v844
          %v877 = vrsqrt.pop %v845
          %v878 = vrsqrt.pop %v846
          %v879 = vrsqrt.pop %v847
          %v880 = vrsqrt.pop %v848
          %v881 = vrsqrt.pop %v849
          %v882 = vrsqrt.pop %v850
          %v883 = vrsqrt.pop %v851
          %v884 = vrsqrt.pop %v852
          %v885 = vrsqrt.pop %v853
          %v886 = vrsqrt.pop %v854
          %v887 = vrsqrt.pop %v855
          %v888 = vrsqrt.pop %v856
          %v889 = vrsqrt.pop %v857
          %v890 = vrsqrt.pop %v858
          %v891 = vrsqrt.pop %v859
          %v892 = vrsqrt.pop %v860
          %v893 = vrsqrt.pop %v861
          %v894 = vrsqrt.pop %v862
          %v895 = vmul.f32 %v575, %v863
          %v896 = vmul.f32 %v576, %v863
          %v897 = vmul.f32 %v577, %v864
          %v898 = vmul.f32 %v578, %v864
          %v899 = vmul.f32 %v579, %v865
          %v900 = vmul.f32 %v580, %v865
          %v901 = vmul.f32 %v581, %v866
          %v902 = vmul.f32 %v582, %v866
          %v903 = vmul.f32 %v583, %v867
          %v904 = vmul.f32 %v584, %v867
          %v905 = vmul.f32 %v585, %v868
          %v906 = vmul.f32 %v586, %v868
          %v907 = vmul.f32 %v587, %v869
          %v908 = vmul.f32 %v588, %v869
          %v909 = vmul.f32 %v589, %v870
          %v910 = vmul.f32 %v590, %v870
          %v911 = vmul.f32 %v591, %v871
          %v912 = vmul.f32 %v592, %v871
          %v913 = vmul.f32 %v593, %v872
          %v914 = vmul.f32 %v594, %v872
          %v915 = vmul.f32 %v595, %v873
          %v916 = vmul.f32 %v596, %v873
          %v917 = vmul.f32 %v597, %v874
          %v918 = vmul.f32 %v598, %v874
          %v919 = vmul.f32 %v599, %v875
          %v920 = vmul.f32 %v600, %v875
          %v921 = vmul.f32 %v601, %v876
          %v922 = vmul.f32 %v602, %v876
          %v923 = vmul.f32 %v603, %v877
          %v924 = vmul.f32 %v604, %v877
          %v925 = vmul.f32 %v605, %v878
          %v926 = vmul.f32 %v606, %v878
          %v927 = vmul.f32 %v607, %v879
          %v928 = vmul.f32 %v608, %v879
          %v929 = vmul.f32 %v609, %v880
          %v930 = vmul.f32 %v610, %v880
          %v931 = vmul.f32 %v611, %v881
          %v932 = vmul.f32 %v612, %v881
          %v933 = vmul.f32 %v613, %v882
          %v934 = vmul.f32 %v614, %v882
          %v935 = vmul.f32 %v615, %v883
          %v936 = vmul.f32 %v616, %v883
          %v937 = vmul.f32 %v617, %v884
          %v938 = vmul.f32 %v618, %v884
          %v939 = vmul.f32 %v619, %v885
          %v940 = vmul.f32 %v620, %v885
          %v941 = vmul.f32 %v621, %v886
          %v942 = vmul.f32 %v622, %v886
          %v943 = vmul.f32 %v623, %v887
          %v944 = vmul.f32 %v624, %v887
          %v945 = vmul.f32 %v625, %v888
          %v946 = vmul.f32 %v626, %v888
          %v947 = vmul.f32 %v627, %v889
          %v948 = vmul.f32 %v628, %v889
          %v949 = vmul.f32 %v629, %v890
          %v950 = vmul.f32 %v630, %v890
          %v951 = vmul.f32 %v631, %v891
          %v952 = vmul.f32 %v632, %v891
          %v953 = vmul.f32 %v633, %v892
          %v954 = vmul.f32 %v634, %v892
          %v955 = vmul.f32 %v635, %v893
          %v956 = vmul.f32 %v636, %v893
          %v957 = vmul.f32 %v637, %v894
          %v958 = vmul.f32 %v638, %v894
          %v960 = vlaneseq
          %v961 = vshrl.u32 %v960, 7
          %v962 = vsub.s32 0, %v961
          %v963 = vrot.slane %v444, %v962
          %v964 = vlaneseq
          %v965 = vshrl.u32 %v964, 7
          %v966 = vsub.s32 1, %v965
          %v967 = vrot.slane %v444, %v966
          %v970 = vmul.f32 %v895, %v963
          %v971 = vmul.f32 %v896, %v967
          %v972 = vmul.f32 %v897, %v963
          %v973 = vmul.f32 %v898, %v967
          %v974 = vmul.f32 %v899, %v963
          %v975 = vmul.f32 %v900, %v967
          %v976 = vmul.f32 %v901, %v963
          %v977 = vmul.f32 %v902, %v967
          %v978 = vmul.f32 %v903, %v963
          %v979 = vmul.f32 %v904, %v967
          %v980 = vmul.f32 %v905, %v963
          %v981 = vmul.f32 %v906, %v967
          %v982 = vmul.f32 %v907, %v963
          %v983 = vmul.f32 %v908, %v967
          %v984 = vmul.f32 %v909, %v963
          %v985 = vmul.f32 %v910, %v967
          %v986 = vmul.f32 %v911, %v963
          %v987 = vmul.f32 %v912, %v967
          %v988 = vmul.f32 %v913, %v963
          %v989 = vmul.f32 %v914, %v967
          %v990 = vmul.f32 %v915, %v963
          %v991 = vmul.f32 %v916, %v967
          %v992 = vmul.f32 %v917, %v963
          %v993 = vmul.f32 %v918, %v967
          %v994 = vmul.f32 %v919, %v963
          %v995 = vmul.f32 %v920, %v967
          %v996 = vmul.f32 %v921, %v963
          %v997 = vmul.f32 %v922, %v967
          %v998 = vmul.f32 %v923, %v963
          %v999 = vmul.f32 %v924, %v967
          %v1000 = vmul.f32 %v925, %v963
          %v1001 = vmul.f32 %v926, %v967
          %v1002 = vmul.f32 %v927, %v963
          %v1003 = vmul.f32 %v928, %v967
          %v1004 = vmul.f32 %v929, %v963
          %v1005 = vmul.f32 %v930, %v967
          %v1006 = vmul.f32 %v931, %v963
          %v1007 = vmul.f32 %v932, %v967
          %v1008 = vmul.f32 %v933, %v963
          %v1009 = vmul.f32 %v934, %v967
          %v1010 = vmul.f32 %v935, %v963
          %v1011 = vmul.f32 %v936, %v967
          %v1012 = vmul.f32 %v937, %v963
          %v1013 = vmul.f32 %v938, %v967
          %v1014 = vmul.f32 %v939, %v963
          %v1015 = vmul.f32 %v940, %v967
          %v1016 = vmul.f32 %v941, %v963
          %v1017 = vmul.f32 %v942, %v967
          %v1018 = vmul.f32 %v943, %v963
          %v1019 = vmul.f32 %v944, %v967
          %v1020 = vmul.f32 %v945, %v963
          %v1021 = vmul.f32 %v946, %v967
          %v1022 = vmul.f32 %v947, %v963
          %v1023 = vmul.f32 %v948, %v967
          %v1024 = vmul.f32 %v949, %v963
          %v1025 = vmul.f32 %v950, %v967
          %v1026 = vmul.f32 %v951, %v963
          %v1027 = vmul.f32 %v952, %v967
          %v1028 = vmul.f32 %v953, %v963
          %v1029 = vmul.f32 %v954, %v967
          %v1030 = vmul.f32 %v955, %v963
          %v1031 = vmul.f32 %v956, %v967
          %v1032 = vmul.f32 %v957, %v963
          %v1033 = vmul.f32 %v958, %v967
          %v1035 = vlaneseq
          %v1036 = vshrl.u32 %v1035, 7
          %v1037 = vsub.s32 0, %v1036
          %v1038 = vrot.slane %v445, %v1037
          %v1039 = vlaneseq
          %v1040 = vshrl.u32 %v1039, 7
          %v1041 = vsub.s32 1, %v1040
          %v1042 = vrot.slane %v445, %v1041
          %v1045 = vadd.f32 %v970, %v1038
          %v1046 = vadd.f32 %v971, %v1042
          %v1047 = vadd.f32 %v972, %v1038
          %v1048 = vadd.f32 %v973, %v1042
          %v1049 = vadd.f32 %v974, %v1038
          %v1050 = vadd.f32 %v975, %v1042
          %v1051 = vadd.f32 %v976, %v1038
          %v1052 = vadd.f32 %v977, %v1042
          %v1053 = vadd.f32 %v978, %v1038
          %v1054 = vadd.f32 %v979, %v1042
          %v1055 = vadd.f32 %v980, %v1038
          %v1056 = vadd.f32 %v981, %v1042
          %v1057 = vadd.f32 %v982, %v1038
          %v1058 = vadd.f32 %v983, %v1042
          %v1059 = vadd.f32 %v984, %v1038
          %v1060 = vadd.f32 %v985, %v1042
          %v1061 = vadd.f32 %v986, %v1038
          %v1062 = vadd.f32 %v987, %v1042
          %v1063 = vadd.f32 %v988, %v1038
          %v1064 = vadd.f32 %v989, %v1042
          %v1065 = vadd.f32 %v990, %v1038
          %v1066 = vadd.f32 %v991, %v1042
          %v1067 = vadd.f32 %v992, %v1038
          %v1068 = vadd.f32 %v993, %v1042
          %v1069 = vadd.f32 %v994, %v1038
          %v1070 = vadd.f32 %v995, %v1042
          %v1071 = vadd.f32 %v996, %v1038
          %v1072 = vadd.f32 %v997, %v1042
          %v1073 = vadd.f32 %v998, %v1038
          %v1074 = vadd.f32 %v999, %v1042
          %v1075 = vadd.f32 %v1000, %v1038
          %v1076 = vadd.f32 %v1001, %v1042
          %v1077 = vadd.f32 %v1002, %v1038
          %v1078 = vadd.f32 %v1003, %v1042
          %v1079 = vadd.f32 %v1004, %v1038
          %v1080 = vadd.f32 %v1005, %v1042
          %v1081 = vadd.f32 %v1006, %v1038
          %v1082 = vadd.f32 %v1007, %v1042
          %v1083 = vadd.f32 %v1008, %v1038
          %v1084 = vadd.f32 %v1009, %v1042
          %v1085 = vadd.f32 %v1010, %v1038
          %v1086 = vadd.f32 %v1011, %v1042
          %v1087 = vadd.f32 %v1012, %v1038
          %v1088 = vadd.f32 %v1013, %v1042
          %v1089 = vadd.f32 %v1014, %v1038
          %v1090 = vadd.f32 %v1015, %v1042
          %v1091 = vadd.f32 %v1016, %v1038
          %v1092 = vadd.f32 %v1017, %v1042
          %v1093 = vadd.f32 %v1018, %v1038
          %v1094 = vadd.f32 %v1019, %v1042
          %v1095 = vadd.f32 %v1020, %v1038
          %v1096 = vadd.f32 %v1021, %v1042
          %v1097 = vadd.f32 %v1022, %v1038
          %v1098 = vadd.f32 %v1023, %v1042
          %v1099 = vadd.f32 %v1024, %v1038
          %v1100 = vadd.f32 %v1025, %v1042
          %v1101 = vadd.f32 %v1026, %v1038
          %v1102 = vadd.f32 %v1027, %v1042
          %v1103 = vadd.f32 %v1028, %v1038
          %v1104 = vadd.f32 %v1029, %v1042
          %v1105 = vadd.f32 %v1030, %v1038
          %v1106 = vadd.f32 %v1031, %v1042
          %v1107 = vadd.f32 %v1032, %v1038
          %v1108 = vadd.f32 %v1033, %v1042
          %v1109 = vpack.c.bf16 %v1047, %v1045
          %v1110 = vpack.c.bf16 %v1048, %v1046
          %v1111 = vpack.c.bf16 %v1051, %v1049
          %v1112 = vpack.c.bf16 %v1052, %v1050
          %v1113 = vpack.c.bf16 %v1055, %v1053
          %v1114 = vpack.c.bf16 %v1056, %v1054
          %v1115 = vpack.c.bf16 %v1059, %v1057
          %v1116 = vpack.c.bf16 %v1060, %v1058
          %v1117 = vpack.c.bf16 %v1063, %v1061
          %v1118 = vpack.c.bf16 %v1064, %v1062
          %v1119 = vpack.c.bf16 %v1067, %v1065
          %v1120 = vpack.c.bf16 %v1068, %v1066
          %v1121 = vpack.c.bf16 %v1071, %v1069
          %v1122 = vpack.c.bf16 %v1072, %v1070
          %v1123 = vpack.c.bf16 %v1075, %v1073
          %v1124 = vpack.c.bf16 %v1076, %v1074
          %v1125 = vpack.c.bf16 %v1079, %v1077
          %v1126 = vpack.c.bf16 %v1080, %v1078
          %v1127 = vpack.c.bf16 %v1083, %v1081
          %v1128 = vpack.c.bf16 %v1084, %v1082
          %v1129 = vpack.c.bf16 %v1087, %v1085
          %v1130 = vpack.c.bf16 %v1088, %v1086
          %v1131 = vpack.c.bf16 %v1091, %v1089
          %v1132 = vpack.c.bf16 %v1092, %v1090
          %v1133 = vpack.c.bf16 %v1095, %v1093
          %v1134 = vpack.c.bf16 %v1096, %v1094
          %v1135 = vpack.c.bf16 %v1099, %v1097
          %v1136 = vpack.c.bf16 %v1100, %v1098
          %v1137 = vpack.c.bf16 %v1103, %v1101
          %v1138 = vpack.c.bf16 %v1104, %v1102
          %v1139 = vpack.c.bf16 %v1107, %v1105
          %v1140 = vpack.c.bf16 %v1108, %v1106
          %1141 = vst [vmem:[#allocation2] sm:$0xff] %v1109
          %1142 = vst [vmem:[#allocation2 + $0x8] sm:$0xff] %v1110
          %1143 = vst [vmem:[#allocation2 + $0x10] sm:$0xff] %v1111
          %1144 = vst [vmem:[#allocation2 + $0x18] sm:$0xff] %v1112
          %1145 = vst [vmem:[#allocation2 + $0x20] sm:$0xff] %v1113
          %1146 = vst [vmem:[#allocation2 + $0x28] sm:$0xff] %v1114
          %1147 = vst [vmem:[#allocation2 + $0x30] sm:$0xff] %v1115
          %1148 = vst [vmem:[#allocation2 + $0x38] sm:$0xff] %v1116
          %1149 = vst [vmem:[#allocation2 + $0x40] sm:$0xff] %v1117
          %1150 = vst [vmem:[#allocation2 + $0x48] sm:$0xff] %v1118
          %1151 = vst [vmem:[#allocation2 + $0x50] sm:$0xff] %v1119
          %1152 = vst [vmem:[#allocation2 + $0x58] sm:$0xff] %v1120
          %1153 = vst [vmem:[#allocation2 + $0x60] sm:$0xff] %v1121
          %1154 = vst [vmem:[#allocation2 + $0x68] sm:$0xff] %v1122
          %1155 = vst [vmem:[#allocation2 + $0x70] sm:$0xff] %v1123
          %1156 = vst [vmem:[#allocation2 + $0x78] sm:$0xff] %v1124
          %1157 = vst [vmem:[#allocation2 + $0x80] sm:$0xff] %v1125
          %1158 = vst [vmem:[#allocation2 + $0x88] sm:$0xff] %v1126
          %1159 = vst [vmem:[#allocation2 + $0x90] sm:$0xff] %v1127
          %1160 = vst [vmem:[#allocation2 + $0x98] sm:$0xff] %v1128
          %1161 = vst [vmem:[#allocation2 + $0xa0] sm:$0xff] %v1129
          %1162 = vst [vmem:[#allocation2 + $0xa8] sm:$0xff] %v1130
          %1163 = vst [vmem:[#allocation2 + $0xb0] sm:$0xff] %v1131
          %1164 = vst [vmem:[#allocation2 + $0xb8] sm:$0xff] %v1132
          %1165 = vst [vmem:[#allocation2 + $0xc0] sm:$0xff] %v1133
          %1166 = vst [vmem:[#allocation2 + $0xc8] sm:$0xff] %v1134
          %1167 = vst [vmem:[#allocation2 + $0xd0] sm:$0xff] %v1135
          %1168 = vst [vmem:[#allocation2 + $0xd8] sm:$0xff] %v1136
          %1169 = vst [vmem:[#allocation2 + $0xe0] sm:$0xff] %v1137
          %1170 = vst [vmem:[#allocation2 + $0xe8] sm:$0xff] %v1138
          %1171 = vst [vmem:[#allocation2 + $0xf0] sm:$0xff] %v1139
          %1172 = vst [vmem:[#allocation2 + $0xf8] sm:$0xff] %v1140
        $region64: #{tpu_custom_call.1} parent=39 // pred_fallthru
          _
        %v1173 = vld [vmem:[#allocation2] sm:$0xff]
        %v1174 = vld [vmem:[#allocation2 + $0x8] sm:$0xff]
        %v1175 = vld [vmem:[#allocation2 + $0x10] sm:$0xff]
        %v1176 = vld [vmem:[#allocation2 + $0x18] sm:$0xff]
        %v1177 = vld [vmem:[#allocation2 + $0x20] sm:$0xff]
        %v1178 = vld [vmem:[#allocation2 + $0x28] sm:$0xff]
        %v1179 = vld [vmem:[#allocation2 + $0x30] sm:$0xff]
        %v1180 = vld [vmem:[#allocation2 + $0x38] sm:$0xff]
        %v1181 = vld [vmem:[#allocation2 + $0x40] sm:$0xff]
        %v1182 = vld [vmem:[#allocation2 + $0x48] sm:$0xff]
        %v1183 = vld [vmem:[#allocation2 + $0x50] sm:$0xff]
        %v1184 = vld [vmem:[#allocation2 + $0x58] sm:$0xff]
        %v1185 = vld [vmem:[#allocation2 + $0x60] sm:$0xff]
        %v1186 = vld [vmem:[#allocation2 + $0x68] sm:$0xff]
        %v1187 = vld [vmem:[#allocation2 + $0x70] sm:$0xff]
        %v1188 = vld [vmem:[#allocation2 + $0x78] sm:$0xff]
        %v1189 = vld [vmem:[#allocation2 + $0x80] sm:$0xff]
        %v1190 = vld [vmem:[#allocation2 + $0x88] sm:$0xff]
        %v1191 = vld [vmem:[#allocation2 + $0x90] sm:$0xff]
        %v1192 = vld [vmem:[#allocation2 + $0x98] sm:$0xff]
        %v1193 = vld [vmem:[#allocation2 + $0xa0] sm:$0xff]
        %v1194 = vld [vmem:[#allocation2 + $0xa8] sm:$0xff]
        %v1195 = vld [vmem:[#allocation2 + $0xb0] sm:$0xff]
        %v1196 = vld [vmem:[#allocation2 + $0xb8] sm:$0xff]
        %v1197 = vld [vmem:[#allocation2 + $0xc0] sm:$0xff]
        %v1198 = vld [vmem:[#allocation2 + $0xc8] sm:$0xff]
        %v1199 = vld [vmem:[#allocation2 + $0xd0] sm:$0xff]
        %v1200 = vld [vmem:[#allocation2 + $0xd8] sm:$0xff]
        %v1201 = vld [vmem:[#allocation2 + $0xe0] sm:$0xff]
        %v1202 = vld [vmem:[#allocation2 + $0xe8] sm:$0xff]
        %v1203 = vld [vmem:[#allocation2 + $0xf0] sm:$0xff]
        %v1204 = vld [vmem:[#allocation2 + $0xf8] sm:$0xff]
        %v1205 = vld [vmem:[%s317] sm:$0xff]
        %v1206 = vld [vmem:[%s317 + $0x8] sm:$0xff]
        %v1207 = vld [vmem:[%s317 + $0x10] sm:$0xff]
        %v1208 = vld [vmem:[%s317 + $0x18] sm:$0xff]
        %v1209 = vld [vmem:[%s317 + $0x20] sm:$0xff]
        %v1210 = vld [vmem:[%s317 + $0x28] sm:$0xff]
        %v1211 = vld [vmem:[%s317 + $0x30] sm:$0xff]
        %v1212 = vld [vmem:[%s317 + $0x38] sm:$0xff]
        %v1213 = vld [vmem:[%s317 + $0x40] sm:$0xff]
        %v1214 = vld [vmem:[%s317 + $0x48] sm:$0xff]
        %v1215 = vld [vmem:[%s317 + $0x50] sm:$0xff]
        %v1216 = vld [vmem:[%s317 + $0x58] sm:$0xff]
        %v1217 = vld [vmem:[%s317 + $0x60] sm:$0xff]
        %v1218 = vld [vmem:[%s317 + $0x68] sm:$0xff]
        %v1219 = vld [vmem:[%s317 + $0x70] sm:$0xff]
        %v1220 = vld [vmem:[%s317 + $0x78] sm:$0xff]
        %v1221 = vld [vmem:[%s317 + $0x80] sm:$0xff]
        %v1222 = vld [vmem:[%s317 + $0x88] sm:$0xff]
        %v1223 = vld [vmem:[%s317 + $0x90] sm:$0xff]
        %v1224 = vld [vmem:[%s317 + $0x98] sm:$0xff]
        %v1225 = vld [vmem:[%s317 + $0xa0] sm:$0xff]
        %v1226 = vld [vmem:[%s317 + $0xa8] sm:$0xff]
        %v1227 = vld [vmem:[%s317 + $0xb0] sm:$0xff]
        %v1228 = vld [vmem:[%s317 + $0xb8] sm:$0xff]
        %v1229 = vld [vmem:[%s317 + $0xc0] sm:$0xff]
        %v1230 = vld [vmem:[%s317 + $0xc8] sm:$0xff]
        %v1231 = vld [vmem:[%s317 + $0xd0] sm:$0xff]
        %v1232 = vld [vmem:[%s317 + $0xd8] sm:$0xff]
        %v1233 = vld [vmem:[%s317 + $0xe0] sm:$0xff]
        %v1234 = vld [vmem:[%s317 + $0xe8] sm:$0xff]
        %v1235 = vld [vmem:[%s317 + $0xf0] sm:$0xff]
        %v1236 = vld [vmem:[%s317 + $0xf8] sm:$0xff]
        %v1237 = vld [vmem:[%s326] sm:$0x3]
        %v1239 = vlaneseq
        %v1240 = vshrl.u32 %v1239, 7
        %v1241 = vsub.s32 0, %v1240
        %v1242 = vrot.slane %v1237, %v1241
        %v1243 = vlaneseq
        %v1244 = vshrl.u32 %v1243, 7
        %v1245 = vsub.s32 1, %v1244
        %v1246 = vrot.slane %v1237, %v1245
        %v1281 = vunpack.c.l.b16 %v1205
        %v1282 = vunpack.c.h.b16 %v1205
        %v1283 = vunpack.c.l.b16 %v1206
        %v1284 = vunpack.c.h.b16 %v1206
        %v1285 = vunpack.c.l.b16 %v1207
        %v1286 = vunpack.c.h.b16 %v1207
        %v1287 = vunpack.c.l.b16 %v1208
        %v1288 = vunpack.c.h.b16 %v1208
        %v1289 = vunpack.c.l.b16 %v1209
        %v1290 = vunpack.c.h.b16 %v1209
        %v1291 = vunpack.c.l.b16 %v1210
        %v1292 = vunpack.c.h.b16 %v1210
        %v1293 = vunpack.c.l.b16 %v1211
        %v1294 = vunpack.c.h.b16 %v1211
        %v1295 = vunpack.c.l.b16 %v1212
        %v1296 = vunpack.c.h.b16 %v1212
        %v1297 = vunpack.c.l.b16 %v1213
        %v1298 = vunpack.c.h.b16 %v1213
        %v1299 = vunpack.c.l.b16 %v1214
        %v1300 = vunpack.c.h.b16 %v1214
        %v1301 = vunpack.c.l.b16 %v1215
        %v1302 = vunpack.c.h.b16 %v1215
        %v1303 = vunpack.c.l.b16 %v1216
        %v1304 = vunpack.c.h.b16 %v1216
        %v1305 = vunpack.c.l.b16 %v1217
        %v1306 = vunpack.c.h.b16 %v1217
        %v1307 = vunpack.c.l.b16 %v1218
        %v1308 = vunpack.c.h.b16 %v1218
        %v1309 = vunpack.c.l.b16 %v1219
        %v1310 = vunpack.c.h.b16 %v1219
        %v1311 = vunpack.c.l.b16 %v1220
        %v1312 = vunpack.c.h.b16 %v1220
        %v1313 = vunpack.c.l.b16 %v1221
        %v1314 = vunpack.c.h.b16 %v1221
        %v1315 = vunpack.c.l.b16 %v1222
        %v1316 = vunpack.c.h.b16 %v1222
        %v1317 = vunpack.c.l.b16 %v1223
        %v1318 = vunpack.c.h.b16 %v1223
        %v1319 = vunpack.c.l.b16 %v1224
        %v1320 = vunpack.c.h.b16 %v1224
        %v1321 = vunpack.c.l.b16 %v1225
        %v1322 = vunpack.c.h.b16 %v1225
        %v1323 = vunpack.c.l.b16 %v1226
        %v1324 = vunpack.c.h.b16 %v1226
        %v1325 = vunpack.c.l.b16 %v1227
        %v1326 = vunpack.c.h.b16 %v1227
        %v1327 = vunpack.c.l.b16 %v1228
        %v1328 = vunpack.c.h.b16 %v1228
        %v1329 = vunpack.c.l.b16 %v1229
        %v1330 = vunpack.c.h.b16 %v1229
        %v1331 = vunpack.c.l.b16 %v1230
        %v1332 = vunpack.c.h.b16 %v1230
        %v1333 = vunpack.c.l.b16 %v1231
        %v1334 = vunpack.c.h.b16 %v1231
        %v1335 = vunpack.c.l.b16 %v1232
        %v1336 = vunpack.c.h.b16 %v1232
        %v1337 = vunpack.c.l.b16 %v1233
        %v1338 = vunpack.c.h.b16 %v1233
        %v1339 = vunpack.c.l.b16 %v1234
        %v1340 = vunpack.c.h.b16 %v1234
        %v1341 = vunpack.c.l.b16 %v1235
        %v1342 = vunpack.c.h.b16 %v1235
        %v1343 = vunpack.c.l.b16 %v1236
        %v1344 = vunpack.c.h.b16 %v1236
        %v1345 = vpack.c.b16 %v1283, %v1281
        %v1346 = vpack.c.b16 %v1284, %v1282
        %v1347 = vpack.c.b16 %v1287, %v1285
        %v1348 = vpack.c.b16 %v1288, %v1286
        %v1349 = vpack.c.b16 %v1291, %v1289
        %v1350 = vpack.c.b16 %v1292, %v1290
        %v1351 = vpack.c.b16 %v1295, %v1293
        %v1352 = vpack.c.b16 %v1296, %v1294
        %v1353 = vpack.c.b16 %v1299, %v1297
        %v1354 = vpack.c.b16 %v1300, %v1298
        %v1355 = vpack.c.b16 %v1303, %v1301
        %v1356 = vpack.c.b16 %v1304, %v1302
        %v1357 = vpack.c.b16 %v1307, %v1305
        %v1358 = vpack.c.b16 %v1308, %v1306
        %v1359 = vpack.c.b16 %v1311, %v1309
        %v1360 = vpack.c.b16 %v1312, %v1310
        %v1361 = vpack.c.b16 %v1315, %v1313
        %v1362 = vpack.c.b16 %v1316, %v1314
        %v1363 = vpack.c.b16 %v1319, %v1317
        %v1364 = vpack.c.b16 %v1320, %v1318
        %v1365 = vpack.c.b16 %v1323, %v1321
        %v1366 = vpack.c.b16 %v1324, %v1322
        %v1367 = vpack.c.b16 %v1327, %v1325
        %v1368 = vpack.c.b16 %v1328, %v1326
        %v1369 = vpack.c.b16 %v1331, %v1329
        %v1370 = vpack.c.b16 %v1332, %v1330
        %v1371 = vpack.c.b16 %v1335, %v1333
        %v1372 = vpack.c.b16 %v1336, %v1334
        %v1373 = vpack.c.b16 %v1339, %v1337
        %v1374 = vpack.c.b16 %v1340, %v1338
        %v1375 = vpack.c.b16 %v1343, %v1341
        %v1376 = vpack.c.b16 %v1344, %v1342
        %1409 = vmatprep.subr.bf16.mxu0 %v1346
        %1410 = vmatpush1.bf16.msra.mxu0 %v1345
        %1411 = vmatprep.subr.bf16.mxu0 %v1348
        %1412 = vmatpush1.bf16.msra.mxu0 %v1347
        %1413 = vmatprep.subr.bf16.mxu0 %v1350
        %1414 = vmatpush1.bf16.msra.mxu0 %v1349
        %1415 = vmatprep.subr.bf16.mxu0 %v1352
        %1416 = vmatpush1.bf16.msra.mxu0 %v1351
        %1417 = vmatprep.subr.bf16.mxu0 %v1354
        %1418 = vmatpush1.bf16.msra.mxu0 %v1353
        %1419 = vmatprep.subr.bf16.mxu0 %v1356
        %1420 = vmatpush1.bf16.msra.mxu0 %v1355
        %1421 = vmatprep.subr.bf16.mxu0 %v1358
        %1422 = vmatpush1.bf16.msra.mxu0 %v1357
        %1423 = vmatprep.subr.bf16.mxu0 %v1360
        %1424 = vmatpush1.bf16.msra.mxu0 %v1359
        %1425 = vmatprep.subr.bf16.mxu0 %v1362
        %1426 = vmatpush1.bf16.msra.mxu0 %v1361
        %1427 = vmatprep.subr.bf16.mxu0 %v1364
        %1428 = vmatpush1.bf16.msra.mxu0 %v1363
        %1429 = vmatprep.subr.bf16.mxu0 %v1366
        %1430 = vmatpush1.bf16.msra.mxu0 %v1365
        %1431 = vmatprep.subr.bf16.mxu0 %v1368
        %1432 = vmatpush1.bf16.msra.mxu0 %v1367
        %1433 = vmatprep.subr.bf16.mxu0 %v1370
        %1434 = vmatpush1.bf16.msra.mxu0 %v1369
        %1435 = vmatprep.subr.bf16.mxu0 %v1372
        %1436 = vmatpush1.bf16.msra.mxu0 %v1371
        %1437 = vmatprep.subr.bf16.mxu0 %v1374
        %1438 = vmatpush1.bf16.msra.mxu0 %v1373
        %1439 = vmatprep.subr.bf16.mxu0 %v1376
        %1440 = vmatpush1.bf16.msra.mxu0 %v1375
        %1441 = vmatprep.mubr.bf16.mxu0 %v1174
        %1442 = vmatmul.mubr.bf16.gmra.mrb[0].mxu0 %v1173
        %v1443 = vpop.f32.mrb[0].mxu0
        %v1444 = vadd.f32 %v1242, %v1443
        %v1445 = vpop.f32.mrb[0].mxu0
        %v1446 = vadd.f32 %v1246, %v1445
        %v1447 = vpop.f32.mrb[0].mxu0
        %v1448 = vadd.f32 %v1242, %v1447
        %v1449 = vpop.f32.mrb[0].mxu0
        %v1450 = vadd.f32 %v1246, %v1449
        %1451 = vmatprep.mubr.bf16.mxu0 %v1176
        %1452 = vmatmul.mubr.bf16.gmra.mrb[0].mxu0 %v1175
        %v1453 = vpop.f32.mrb[0].mxu0
        %v1454 = vadd.f32 %v1242, %v1453
        %v1455 = vpop.f32.mrb[0].mxu0
        %v1456 = vadd.f32 %v1246, %v1455
        %v1457 = vpop.f32.mrb[0].mxu0
        %v1458 = vadd.f32 %v1242, %v1457
        %v1459 = vpop.f32.mrb[0].mxu0
        %v1460 = vadd.f32 %v1246, %v1459
        %1461 = vmatprep.mubr.bf16.mxu0 %v1178
        %1462 = vmatmul.mubr.bf16.gmra.mrb[0].mxu0 %v1177
        %v1463 = vpop.f32.mrb[0].mxu0
        %v1464 = vadd.f32 %v1242, %v1463
        %v1465 = vpop.f32.mrb[0].mxu0
        %v1466 = vadd.f32 %v1246, %v1465
        %v1467 = vpop.f32.mrb[0].mxu0
        %v1468 = vadd.f32 %v1242, %v1467
        %v1469 = vpop.f32.mrb[0].mxu0
        %v1470 = vadd.f32 %v1246, %v1469
        %1471 = vmatprep.mubr.bf16.mxu0 %v1180
        %1472 = vmatmul.mubr.bf16.gmra.mrb[0].mxu0 %v1179
        %v1473 = vpop.f32.mrb[0].mxu0
        %v1474 = vadd.f32 %v1242, %v1473
        %v1475 = vpop.f32.mrb[0].mxu0
        %v1476 = vadd.f32 %v1246, %v1475
        %v1477 = vpop.f32.mrb[0].mxu0
        %v1478 = vadd.f32 %v1242, %v1477
        %v1479 = vpop.f32.mrb[0].mxu0
        %v1480 = vadd.f32 %v1246, %v1479
        %1481 = vmatprep.mubr.bf16.mxu0 %v1182
        %1482 = vmatmul.mubr.bf16.gmra.mrb[0].mxu0 %v1181
        %v1483 = vpop.f32.mrb[0].mxu0
        %v1484 = vadd.f32 %v1242, %v1483
        %v1485 = vpop.f32.mrb[0].mxu0
        %v1486 = vadd.f32 %v1246, %v1485
        %v1487 = vpop.f32.mrb[0].mxu0
        %v1488 = vadd.f32 %v1242, %v1487
        %v1489 = vpop.f32.mrb[0].mxu0
        %v1490 = vadd.f32 %v1246, %v1489
        %1491 = vmatprep.mubr.bf16.mxu0 %v1184
        %1492 = vmatmul.mubr.bf16.gmra.mrb[0].mxu0 %v1183
        %v1493 = vpop.f32.mrb[0].mxu0
        %v1494 = vadd.f32 %v1242, %v1493
        %v1495 = vpop.f32.mrb[0].mxu0
        %v1496 = vadd.f32 %v1246, %v1495
        %v1497 = vpop.f32.mrb[0].mxu0
        %v1498 = vadd.f32 %v1242, %v1497
        %v1499 = vpop.f32.mrb[0].mxu0
        %v1500 = vadd.f32 %v1246, %v1499
        %1501 = vmatprep.mubr.bf16.mxu0 %v1186
        %1502 = vmatmul.mubr.bf16.gmra.mrb[0].mxu0 %v1185
        %v1503 = vpop.f32.mrb[0].mxu0
        %v1504 = vadd.f32 %v1242, %v1503
        %v1505 = vpop.f32.mrb[0].mxu0
        %v1506 = vadd.f32 %v1246, %v1505
        %v1507 = vpop.f32.mrb[0].mxu0
        %v1508 = vadd.f32 %v1242, %v1507
        %v1509 = vpop.f32.mrb[0].mxu0
        %v1510 = vadd.f32 %v1246, %v1509
        %1511 = vmatprep.mubr.bf16.mxu0 %v1188
        %1512 = vmatmul.mubr.bf16.gmra.mrb[0].mxu0 %v1187
        %v1513 = vpop.f32.mrb[0].mxu0
        %v1514 = vadd.f32 %v1242, %v1513
        %v1515 = vpop.f32.mrb[0].mxu0
        %v1516 = vadd.f32 %v1246, %v1515
        %v1517 = vpop.f32.mrb[0].mxu0
        %v1518 = vadd.f32 %v1242, %v1517
        %v1519 = vpop.f32.mrb[0].mxu0
        %v1520 = vadd.f32 %v1246, %v1519
        %1521 = vmatprep.mubr.bf16.mxu0 %v1190
        %1522 = vmatmul.mubr.bf16.gmra.mrb[0].mxu0 %v1189
        %v1523 = vpop.f32.mrb[0].mxu0
        %v1524 = vadd.f32 %v1242, %v1523
        %v1525 = vpop.f32.mrb[0].mxu0
        %v1526 = vadd.f32 %v1246, %v1525
        %v1527 = vpop.f32.mrb[0].mxu0
        %v1528 = vadd.f32 %v1242, %v1527
        %v1529 = vpop.f32.mrb[0].mxu0
        %v1530 = vadd.f32 %v1246, %v1529
        %1531 = vmatprep.mubr.bf16.mxu0 %v1192
        %1532 = vmatmul.mubr.bf16.gmra.mrb[0].mxu0 %v1191
        %v1533 = vpop.f32.mrb[0].mxu0
        %v1534 = vadd.f32 %v1242, %v1533
        %v1535 = vpop.f32.mrb[0].mxu0
        %v1536 = vadd.f32 %v1246, %v1535
        %v1537 = vpop.f32.mrb[0].mxu0
        %v1538 = vadd.f32 %v1242, %v1537
        %v1539 = vpop.f32.mrb[0].mxu0
        %v1540 = vadd.f32 %v1246, %v1539
        %1541 = vmatprep.mubr.bf16.mxu0 %v1194
        %1542 = vmatmul.mubr.bf16.gmra.mrb[0].mxu0 %v1193
        %v1543 = vpop.f32.mrb[0].mxu0
        %v1544 = vadd.f32 %v1242, %v1543
        %v1545 = vpop.f32.mrb[0].mxu0
        %v1546 = vadd.f32 %v1246, %v1545
        %v1547 = vpop.f32.mrb[0].mxu0
        %v1548 = vadd.f32 %v1242, %v1547
        %v1549 = vpop.f32.mrb[0].mxu0
        %v1550 = vadd.f32 %v1246, %v1549
        %1551 = vmatprep.mubr.bf16.mxu0 %v1196
        %1552 = vmatmul.mubr.bf16.gmra.mrb[0].mxu0 %v1195
        %v1553 = vpop.f32.mrb[0].mxu0
        %v1554 = vadd.f32 %v1242, %v1553
        %v1555 = vpop.f32.mrb[0].mxu0
        %v1556 = vadd.f32 %v1246, %v1555
        %v1557 = vpop.f32.mrb[0].mxu0
        %v1558 = vadd.f32 %v1242, %v1557
        %v1559 = vpop.f32.mrb[0].mxu0
        %v1560 = vadd.f32 %v1246, %v1559
        %1561 = vmatprep.mubr.bf16.mxu0 %v1198
        %1562 = vmatmul.mubr.bf16.gmra.mrb[0].mxu0 %v1197
        %v1563 = vpop.f32.mrb[0].mxu0
        %v1564 = vadd.f32 %v1242, %v1563
        %v1565 = vpop.f32.mrb[0].mxu0
        %v1566 = vadd.f32 %v1246, %v1565
        %v1567 = vpop.f32.mrb[0].mxu0
        %v1568 = vadd.f32 %v1242, %v1567
        %v1569 = vpop.f32.mrb[0].mxu0
        %v1570 = vadd.f32 %v1246, %v1569
        %1571 = vmatprep.mubr.bf16.mxu0 %v1200
        %1572 = vmatmul.mubr.bf16.gmra.mrb[0].mxu0 %v1199
        %v1573 = vpop.f32.mrb[0].mxu0
        %v1574 = vadd.f32 %v1242, %v1573
        %v1575 = vpop.f32.mrb[0].mxu0
        %v1576 = vadd.f32 %v1246, %v1575
        %v1577 = vpop.f32.mrb[0].mxu0
        %v1578 = vadd.f32 %v1242, %v1577
        %v1579 = vpop.f32.mrb[0].mxu0
        %v1580 = vadd.f32 %v1246, %v1579
        %1581 = vmatprep.mubr.bf16.mxu0 %v1202
        %1582 = vmatmul.mubr.bf16.gmra.mrb[0].mxu0 %v1201
        %v1583 = vpop.f32.mrb[0].mxu0
        %v1584 = vadd.f32 %v1242, %v1583
        %v1585 = vpop.f32.mrb[0].mxu0
        %v1586 = vadd.f32 %v1246, %v1585
        %v1587 = vpop.f32.mrb[0].mxu0
        %v1588 = vadd.f32 %v1242, %v1587
        %v1589 = vpop.f32.mrb[0].mxu0
        %v1590 = vadd.f32 %v1246, %v1589
        %1591 = vmatprep.mubr.bf16.mxu0 %v1204
        %1592 = vmatmul.mubr.bf16.gmra.mrb[0].mxu0 %v1203
        %v1593 = vpop.f32.mrb[0].mxu0
        %v1594 = vadd.f32 %v1242, %v1593
        %v1595 = vpop.f32.mrb[0].mxu0
        %v1596 = vadd.f32 %v1246, %v1595
        %v1597 = vpop.f32.mrb[0].mxu0
        %v1598 = vadd.f32 %v1242, %v1597
        %v1599 = vpop.f32.mrb[0].mxu0
        %v1600 = vadd.f32 %v1246, %v1599
        %1601 = vdwg.mxu0
        %v1602 = vpack.c.bf16 %v1448, %v1444
        %v1603 = vpack.c.bf16 %v1450, %v1446
        %v1604 = vpack.c.bf16 %v1458, %v1454
        %v1605 = vpack.c.bf16 %v1460, %v1456
        %v1606 = vpack.c.bf16 %v1468, %v1464
        %v1607 = vpack.c.bf16 %v1470, %v1466
        %v1608 = vpack.c.bf16 %v1478, %v1474
        %v1609 = vpack.c.bf16 %v1480, %v1476
        %v1610 = vpack.c.bf16 %v1488, %v1484
        %v1611 = vpack.c.bf16 %v1490, %v1486
        %v1612 = vpack.c.bf16 %v1498, %v1494
        %v1613 = vpack.c.bf16 %v1500, %v1496
        %v1614 = vpack.c.bf16 %v1508, %v1504
        %v1615 = vpack.c.bf16 %v1510, %v1506
        %v1616 = vpack.c.bf16 %v1518, %v1514
        %v1617 = vpack.c.bf16 %v1520, %v1516
        %v1618 = vpack.c.bf16 %v1528, %v1524
        %v1619 = vpack.c.bf16 %v1530, %v1526
        %v1620 = vpack.c.bf16 %v1538, %v1534
        %v1621 = vpack.c.bf16 %v1540, %v1536
        %v1622 = vpack.c.bf16 %v1548, %v1544
        %v1623 = vpack.c.bf16 %v1550, %v1546
        %v1624 = vpack.c.bf16 %v1558, %v1554
        %v1625 = vpack.c.bf16 %v1560, %v1556
        %v1626 = vpack.c.bf16 %v1568, %v1564
        %v1627 = vpack.c.bf16 %v1570, %v1566
        %v1628 = vpack.c.bf16 %v1578, %v1574
        %v1629 = vpack.c.bf16 %v1580, %v1576
        %v1630 = vpack.c.bf16 %v1588, %v1584
        %v1631 = vpack.c.bf16 %v1590, %v1586
        %v1632 = vpack.c.bf16 %v1598, %v1594
        %v1633 = vpack.c.bf16 %v1600, %v1596
        %v1666 = vunpack.c.l.b16 %v1602
        %v1667 = vunpack.c.l.b16 %v1603
        %v1668 = vunpack.c.h.b16 %v1602
        %v1669 = vunpack.c.h.b16 %v1603
        %v1670 = vunpack.c.l.b16 %v1604
        %v1671 = vunpack.c.l.b16 %v1605
        %v1672 = vunpack.c.h.b16 %v1604
        %v1673 = vunpack.c.h.b16 %v1605
        %v1674 = vunpack.c.l.b16 %v1606
        %v1675 = vunpack.c.l.b16 %v1607
        %v1676 = vunpack.c.h.b16 %v1606
        %v1677 = vunpack.c.h.b16 %v1607
        %v1678 = vunpack.c.l.b16 %v1608
        %v1679 = vunpack.c.l.b16 %v1609
        %v1680 = vunpack.c.h.b16 %v1608
        %v1681 = vunpack.c.h.b16 %v1609
        %v1682 = vunpack.c.l.b16 %v1610
        %v1683 = vunpack.c.l.b16 %v1611
        %v1684 = vunpack.c.h.b16 %v1610
        %v1685 = vunpack.c.h.b16 %v1611
        %v1686 = vunpack.c.l.b16 %v1612
        %v1687 = vunpack.c.l.b16 %v1613
        %v1688 = vunpack.c.h.b16 %v1612
        %v1689 = vunpack.c.h.b16 %v1613
        %v1690 = vunpack.c.l.b16 %v1614
        %v1691 = vunpack.c.l.b16 %v1615
        %v1692 = vunpack.c.h.b16 %v1614
        %v1693 = vunpack.c.h.b16 %v1615
        %v1694 = vunpack.c.l.b16 %v1616
        %v1695 = vunpack.c.l.b16 %v1617
        %v1696 = vunpack.c.h.b16 %v1616
        %v1697 = vunpack.c.h.b16 %v1617
        %v1698 = vunpack.c.l.b16 %v1618
        %v1699 = vunpack.c.l.b16 %v1619
        %v1700 = vunpack.c.h.b16 %v1618
        %v1701 = vunpack.c.h.b16 %v1619
        %v1702 = vunpack.c.l.b16 %v1620
        %v1703 = vunpack.c.l.b16 %v1621
        %v1704 = vunpack.c.h.b16 %v1620
        %v1705 = vunpack.c.h.b16 %v1621
        %v1706 = vunpack.c.l.b16 %v1622
        %v1707 = vunpack.c.l.b16 %v1623
        %v1708 = vunpack.c.h.b16 %v1622
        %v1709 = vunpack.c.h.b16 %v1623
        %v1710 = vunpack.c.l.b16 %v1624
        %v1711 = vunpack.c.l.b16 %v1625
        %v1712 = vunpack.c.h.b16 %v1624
        %v1713 = vunpack.c.h.b16 %v1625
        %v1714 = vunpack.c.l.b16 %v1626
        %v1715 = vunpack.c.l.b16 %v1627
        %v1716 = vunpack.c.h.b16 %v1626
        %v1717 = vunpack.c.h.b16 %v1627
        %v1718 = vunpack.c.l.b16 %v1628
        %v1719 = vunpack.c.l.b16 %v1629
        %v1720 = vunpack.c.h.b16 %v1628
        %v1721 = vunpack.c.h.b16 %v1629
        %v1722 = vunpack.c.l.b16 %v1630
        %v1723 = vunpack.c.l.b16 %v1631
        %v1724 = vunpack.c.h.b16 %v1630
        %v1725 = vunpack.c.h.b16 %v1631
        %v1726 = vunpack.c.l.b16 %v1632
        %v1727 = vunpack.c.l.b16 %v1633
        %v1728 = vunpack.c.h.b16 %v1632
        %v1729 = vunpack.c.h.b16 %v1633
        %v1730 = vpack.c.b16 %v1667, %v1666
        %v1731 = vpack.c.b16 %v1669, %v1668
        %v1732 = vpack.c.b16 %v1671, %v1670
        %v1733 = vpack.c.b16 %v1673, %v1672
        %v1734 = vpack.c.b16 %v1675, %v1674
        %v1735 = vpack.c.b16 %v1677, %v1676
        %v1736 = vpack.c.b16 %v1679, %v1678
        %v1737 = vpack.c.b16 %v1681, %v1680
        %v1738 = vpack.c.b16 %v1683, %v1682
        %v1739 = vpack.c.b16 %v1685, %v1684
        %v1740 = vpack.c.b16 %v1687, %v1686
        %v1741 = vpack.c.b16 %v1689, %v1688
        %v1742 = vpack.c.b16 %v1691, %v1690
        %v1743 = vpack.c.b16 %v1693, %v1692
        %v1744 = vpack.c.b16 %v1695, %v1694
        %v1745 = vpack.c.b16 %v1697, %v1696
        %v1746 = vpack.c.b16 %v1699, %v1698
        %v1747 = vpack.c.b16 %v1701, %v1700
        %v1748 = vpack.c.b16 %v1703, %v1702
        %v1749 = vpack.c.b16 %v1705, %v1704
        %v1750 = vpack.c.b16 %v1707, %v1706
        %v1751 = vpack.c.b16 %v1709, %v1708
        %v1752 = vpack.c.b16 %v1711, %v1710
        %v1753 = vpack.c.b16 %v1713, %v1712
        %v1754 = vpack.c.b16 %v1715, %v1714
        %v1755 = vpack.c.b16 %v1717, %v1716
        %v1756 = vpack.c.b16 %v1719, %v1718
        %v1757 = vpack.c.b16 %v1721, %v1720
        %v1758 = vpack.c.b16 %v1723, %v1722
        %v1759 = vpack.c.b16 %v1725, %v1724
        %v1760 = vpack.c.b16 %v1727, %v1726
        %v1761 = vpack.c.b16 %v1729, %v1728
        %1794 = vst [vmem:[%s370] sm:$0xff] %v1730
        %1795 = vst [vmem:[%s370 + $0x8] sm:$0xff] %v1731
        %1796 = vst [vmem:[%s370 + $0x10] sm:$0xff] %v1732
        %1797 = vst [vmem:[%s370 + $0x18] sm:$0xff] %v1733
        %1798 = vst [vmem:[%s370 + $0x20] sm:$0xff] %v1734
        %1799 = vst [vmem:[%s370 + $0x28] sm:$0xff] %v1735
        %1800 = vst [vmem:[%s370 + $0x30] sm:$0xff] %v1736
        %1801 = vst [vmem:[%s370 + $0x38] sm:$0xff] %v1737
        %1802 = vst [vmem:[%s370 + $0x40] sm:$0xff] %v1738
        %1803 = vst [vmem:[%s370 + $0x48] sm:$0xff] %v1739
        %1804 = vst [vmem:[%s370 + $0x50] sm:$0xff] %v1740
        %1805 = vst [vmem:[%s370 + $0x58] sm:$0xff] %v1741
        %1806 = vst [vmem:[%s370 + $0x60] sm:$0xff] %v1742
        %1807 = vst [vmem:[%s370 + $0x68] sm:$0xff] %v1743
        %1808 = vst [vmem:[%s370 + $0x70] sm:$0xff] %v1744
        %1809 = vst [vmem:[%s370 + $0x78] sm:$0xff] %v1745
        %1810 = vst [vmem:[%s370 + $0x80] sm:$0xff] %v1746
        %1811 = vst [vmem:[%s370 + $0x88] sm:$0xff] %v1747
        %1812 = vst [vmem:[%s370 + $0x90] sm:$0xff] %v1748
        %1813 = vst [vmem:[%s370 + $0x98] sm:$0xff] %v1749
        %1814 = vst [vmem:[%s370 + $0xa0] sm:$0xff] %v1750
        %1815 = vst [vmem:[%s370 + $0xa8] sm:$0xff] %v1751
        %1816 = vst [vmem:[%s370 + $0xb0] sm:$0xff] %v1752
        %1817 = vst [vmem:[%s370 + $0xb8] sm:$0xff] %v1753
        %1818 = vst [vmem:[%s370 + $0xc0] sm:$0xff] %v1754
        %1819 = vst [vmem:[%s370 + $0xc8] sm:$0xff] %v1755
        %1820 = vst [vmem:[%s370 + $0xd0] sm:$0xff] %v1756
        %1821 = vst [vmem:[%s370 + $0xd8] sm:$0xff] %v1757
        %1822 = vst [vmem:[%s370 + $0xe0] sm:$0xff] %v1758
        %1823 = vst [vmem:[%s370 + $0xe8] sm:$0xff] %v1759
        %1824 = vst [vmem:[%s370 + $0xf0] sm:$0xff] %v1760
        %1825 = vst [vmem:[%s370 + $0xf8] sm:$0xff] %v1761
        %s1826 = sand.u32 %s179, 1
        %s1827 = scalar_lea.sflag [#allocation5], %s1826
        %s1828 = sand.u32 %s179, 1
        %s1829 = smul.addr %s1828, 256
        %s1830 = scalar_lea.vmem [#allocation12], %s1829
        // Predicated region
        $region65: #{tpu_custom_call.1} parent=39 // pred_check
          %p1831 = pneg %p189
        $region66: #{tpu_custom_call.1} parent=39 // pred_check_branch
          %1833 = sbr.rel (%p1831) target = $region68
        $region67: #{tpu_custom_call.1} parent=39 // pred_region
          %s1834 = smul.u32 32, %s32
          %s1835 = smul.u32 2, %s33
          %s1837 = ssub.s32 4096, 4096
          %1838 = vsyncadd %s1827, %s1837
          %s1839 = smul.addr %s1834, 4
          %s1840 = sadd.s32 %s1835, %s1839
          %s1841 = smul.addr %s31, 256
          %s1842 = sadd.s32 %s1840, %s1841
          %s1843 = smul.addr %s1842, 64
          %s1844 = scalar_lea.hbm %s5, %s1843
          %s1845 = sshll.u32 %s1830, 4
          %s1846 = int_to_ptr.vmem [resolvable:$true] %s1845
          %1851 = dma.vmem_to_hbm [thread:$0]  %s1846, 4096, %s1844, %s1827, 128, 256, 8
        $region68: #{tpu_custom_call.1} parent=39 // pred_fallthru
          _
      $region40: #{tpu_custom_call.1} parent=5 // pred_fallthru
        _
      %p1852 = scmp.le.s32.totalorder 2, %s21
      // Predicated region
      $region69: #{tpu_custom_call.1} parent=5 // pred_check
        %p1853 = pneg %p1852
      $region70: #{tpu_custom_call.1} parent=5 // pred_check_branch
        %1855 = sbr.rel (%p1853) target = $region72
      $region71: #{tpu_custom_call.1} parent=5 // pred_region
        %s1856 = ssub.s32 %s21, 2
        // Predicated region
        $region73: #{tpu_custom_call.1} parent=71 // pred_check
          %p1857 = pneg %p195
        $region74: #{tpu_custom_call.1} parent=71 // pred_check_branch
          %1859 = sbr.rel (%p1857) target = $region76
        $region75: #{tpu_custom_call.1} parent=71 // pred_region
          %s1860 = sand.u32 %s180, 1
          %s1861 = scalar_lea.sflag [#allocation5], %s1860
          %s1862 = sand.u32 %s180, 1
          %s1863 = smul.addr %s1862, 256
          %s1864 = scalar_lea.vmem [#allocation12], %s1863
          %1865 = dma.done %s1861, 4096
        $region76: #{tpu_custom_call.1} parent=71 // pred_fallthru
          _
      $region72: #{tpu_custom_call.1} parent=5 // pred_fallthru
        _
    $region6: #{tpu_custom_call.1} parent=1 // loop_footer
      %s25 = sadd.s32 1, %s21
    $region7: #{tpu_custom_call.1} parent=1 // loop_footer_branch
      %20 = sbr.rel target = $region3
    $region8: #{tpu_custom_call.1} parent=1 // loop_exit
      _
    %1866 = vsyncpa [#allocation4], 1
    %s1867 = scalar_lea.sflag [#allocation4], 1
    %1868 = vsyncpa %s1867, 1
    %1869 = vsyncpa [#allocation7], 1
    %s1870 = scalar_lea.sflag [#allocation7], 1
    %1871 = vsyncpa %s1870, 1
    %1872 = vsyncpa [#allocation10], 1
    %1873 = vsyncpa [#allocation5], 1
    %s1874 = scalar_lea.sflag [#allocation5], 1
    %1875 = vsyncpa %s1874, 1

</llo_original>
